<compile_context>
chip_gen: v7x
topology: tpu7x:2x2x1
jax: 0.10.0
libtpu: 0.0.40
codegen_flags: <defaults>
</compile_context>

<pallas_src>
import jax
import jax.numpy as jnp
from jax.experimental import pallas as pl
from jax.experimental.pallas import tpu as pltpu


# ----------------------------- Pallas kernel --------------------------------
def _iterable_refine_kernel(w_ref, b_ref, x_ref, r_ref, o_ref):
    # w_ref: SMEM (72,) f32   conv weights, flattened as w[c, 3*di + dj]
    # b_ref: SMEM (8,)  f32   conv bias
    # x_ref: VMEM (B, C, H, W)  image(s) to refine
    # r_ref: VMEM (B, 1, H, W)  conv input
    # o_ref: VMEM (B, C, H, W)  output (aliased with x in HBM)
    B, C, H, W = x_ref.shape

    # Hoisted scalar weight reads (SMEM) and edge masks (no per-iter broadcasts).
    wvals = [w_ref[i] for i in range(72)]
    bvals = [b_ref[c] for c in range(8)]
    row_idx = jax.lax.broadcasted_iota(jnp.int32, (H, W), 0)
    col_idx = jax.lax.broadcasted_iota(jnp.int32, (H, W), 1)
    edge_mask = {
        (0, -1): row_idx == 0,
        (0, +1): row_idx == H - 1,
        (1, -1): col_idx == 0,
        (1, +1): col_idx == W - 1,
    }

    def shift_edge(a, d, axis):
        """result[i] = a[clamp(i + d, 0, n-1)] along `axis` (replicate pad)."""
        if d == 0:
            return a
        n = a.shape[axis]
        # roll so interior is a[i + d]; the clamped border keeps the original
        # value at that same position, so a plain select against `a` fixes it.
        rolled = pltpu.roll(a, (-d) % n, axis)          # XLU
        return jnp.where(edge_mask[(axis, d)], a, rolled)

    for bidx in range(B):
        r = r_ref[bidx, 0].astype(jnp.float32)          # (H, W)

        # 3 row-shifted copies, then 9 fully shifted slabs (replicate taps).
        rows = {d: shift_edge(r, d, 0) for d in (-1, 0, 1)}
        slabs = [shift_edge(rows[di - 1], dj - 1, 1)
                 for di in range(3) for dj in range(3)]

        # Per output channel: 9 scalar-vector FMAs + tanh (EUP).
        feats = []
        for c in range(8):
            acc = bvals[c] + slabs[0] * wvals[c * 9]
            for t in range(1, 9):
                acc = acc + slabs[t] * wvals[c * 9 + t]
            feats.append(jnp.tanh(acc))

        # Sequential curve refinement + clamp, per image channel (C=1 here).
        for cidx in range(C):
            x = x_ref[bidx, cidx].astype(jnp.float32)   # (H, W)
            for fc in feats:
                x = x - fc * (x * x - x)
            o_ref[bidx, cidx] = jnp.clip(x, 0.0, 1.0).astype(o_ref.dtype)


# ----------------------------- wrapper ---------------------------------------
def iterable_refine(params, x, r):
    B, C, H, W = x.shape
    Br, Cr, Hr, Wr = r.shape
    assert (Br, Hr, Wr) == (B, H, W) and Cr == 1, (x.shape, r.shape)
    w = params["conv_w"].reshape(72).astype(jnp.float32)   # (8,1,3,3) -> (72,)
    b = params["conv_b"].reshape(8).astype(jnp.float32)

    # Gridless: whole problem fits comfortably in VMEM at these sizes; one
    # kernel invocation avoids per-grid-step overhead on single-TC chips.
    return pl.pallas_call(
        _iterable_refine_kernel,
        out_shape=jax.ShapeDtypeStruct((B, C, H, W), x.dtype),
        in_specs=[
            pl.BlockSpec(memory_space=pltpu.MemorySpace.SMEM),   # conv_w (72,)
            pl.BlockSpec(memory_space=pltpu.MemorySpace.SMEM),   # conv_b (8,)
            pl.BlockSpec(memory_space=pltpu.MemorySpace.VMEM),   # x
            pl.BlockSpec(memory_space=pltpu.MemorySpace.VMEM),   # r
        ],
        out_specs=pl.BlockSpec(memory_space=pltpu.MemorySpace.VMEM),
        input_output_aliases={2: 0},                             # x -> out (P8)
    )(w, b, x, r)


# ----------------------------- pure-JAX reference ----------------------------
def iterable_refine_reference(params, x, r):
    w = params["conv_w"].astype(jnp.float32)
    b = params["conv_b"].astype(jnp.float32)
    rpad = jnp.pad(r, ((0, 0), (0, 0), (1, 1), (1, 1)), mode="edge")
    feat = jax.lax.conv_general_dilated(
        rpad, w, (1, 1), "VALID",
        dimension_numbers=("NCHW", "OIHW", "NCHW"),
        precision=jax.lax.Precision.HIGHEST)
    feat = jnp.tanh(feat + b[None, :, None, None])
    for c in range(8):
        rc = feat[:, c:c + 1]
        x = x - rc * (x * x - x)
    return jnp.clip(x, 0.0, 1.0)


# ----------------------------------- main -------------------------------------
if __name__ == "__main__":
    key = jax.random.PRNGKey(0)
    kx, kr, kw, kb = jax.random.split(key, 4)

    B, C, H, W = 2, 1, 16, 128          # W=128 -> lane-dense stores
    x = jax.random.uniform(kx, (B, C, H, W), jnp.float32)       # image-like [0,1]
    r = jax.random.normal(kr, (B, 1, H, W), jnp.float32)
    params = dict(
        conv_w=0.2 * jax.random.normal(kw, (8, 1, 3, 3), jnp.float32),
        conv_b=0.1 * jax.random.normal(kb, (8,), jnp.float32),
    )

    refine = jax.jit(iterable_refine)
    out = jax.block_until_ready(refine(params, x, r))
    ref = jax.block_until_ready(iterable_refine_reference(params, x, r))

    assert out.shape == (B, C, H, W), out.shape
    max_err = float(jnp.max(jnp.abs(out - ref)))
    assert jnp.allclose(out, ref, rtol=1e-3, atol=1e-3), max_err

    print("KERNEL_OK")
</pallas_src>

<mosaic_0001>
module attributes {stable_mosaic.version = 11 : i64} {
  func.func @_iterable_refine_kernel(%arg0: memref<72xf32, #tpu.memory_space<smem>>, %arg1: memref<8xf32, #tpu.memory_space<smem>>, %arg2: memref<2x1x16x128xf32, #tpu.memory_space<vmem>>, %arg3: memref<2x1x16x128xf32, #tpu.memory_space<vmem>>, %arg4: memref<2x1x16x128xf32, #tpu.memory_space<vmem>>) attributes {dimension_semantics = [], scalar_prefetch = 0 : i64, scratch_operands = 0 : i64, tpu.core_type = #tpu.core_type<tc>} {
    %c0 = arith.constant 0 : index
    %0 = memref.load %arg0[%c0] : memref<72xf32, #tpu.memory_space<smem>>
    %c1 = arith.constant 1 : index
    %1 = memref.load %arg0[%c1] : memref<72xf32, #tpu.memory_space<smem>>
    %c2 = arith.constant 2 : index
    %2 = memref.load %arg0[%c2] : memref<72xf32, #tpu.memory_space<smem>>
    %c3 = arith.constant 3 : index
    %3 = memref.load %arg0[%c3] : memref<72xf32, #tpu.memory_space<smem>>
    %c4 = arith.constant 4 : index
    %4 = memref.load %arg0[%c4] : memref<72xf32, #tpu.memory_space<smem>>
    %c5 = arith.constant 5 : index
    %5 = memref.load %arg0[%c5] : memref<72xf32, #tpu.memory_space<smem>>
    %c6 = arith.constant 6 : index
    %6 = memref.load %arg0[%c6] : memref<72xf32, #tpu.memory_space<smem>>
    %c7 = arith.constant 7 : index
    %7 = memref.load %arg0[%c7] : memref<72xf32, #tpu.memory_space<smem>>
    %c8 = arith.constant 8 : index
    %8 = memref.load %arg0[%c8] : memref<72xf32, #tpu.memory_space<smem>>
    %c9 = arith.constant 9 : index
    %9 = memref.load %arg0[%c9] : memref<72xf32, #tpu.memory_space<smem>>
    %c10 = arith.constant 10 : index
    %10 = memref.load %arg0[%c10] : memref<72xf32, #tpu.memory_space<smem>>
    %c11 = arith.constant 11 : index
    %11 = memref.load %arg0[%c11] : memref<72xf32, #tpu.memory_space<smem>>
    %c12 = arith.constant 12 : index
    %12 = memref.load %arg0[%c12] : memref<72xf32, #tpu.memory_space<smem>>
    %c13 = arith.constant 13 : index
    %13 = memref.load %arg0[%c13] : memref<72xf32, #tpu.memory_space<smem>>
    %c14 = arith.constant 14 : index
    %14 = memref.load %arg0[%c14] : memref<72xf32, #tpu.memory_space<smem>>
    %c15 = arith.constant 15 : index
    %15 = memref.load %arg0[%c15] : memref<72xf32, #tpu.memory_space<smem>>
    %c16 = arith.constant 16 : index
    %16 = memref.load %arg0[%c16] : memref<72xf32, #tpu.memory_space<smem>>
    %c17 = arith.constant 17 : index
    %17 = memref.load %arg0[%c17] : memref<72xf32, #tpu.memory_space<smem>>
    %c18 = arith.constant 18 : index
    %18 = memref.load %arg0[%c18] : memref<72xf32, #tpu.memory_space<smem>>
    %c19 = arith.constant 19 : index
    %19 = memref.load %arg0[%c19] : memref<72xf32, #tpu.memory_space<smem>>
    %c20 = arith.constant 20 : index
    %20 = memref.load %arg0[%c20] : memref<72xf32, #tpu.memory_space<smem>>
    %c21 = arith.constant 21 : index
    %21 = memref.load %arg0[%c21] : memref<72xf32, #tpu.memory_space<smem>>
    %c22 = arith.constant 22 : index
    %22 = memref.load %arg0[%c22] : memref<72xf32, #tpu.memory_space<smem>>
    %c23 = arith.constant 23 : index
    %23 = memref.load %arg0[%c23] : memref<72xf32, #tpu.memory_space<smem>>
    %c24 = arith.constant 24 : index
    %24 = memref.load %arg0[%c24] : memref<72xf32, #tpu.memory_space<smem>>
    %c25 = arith.constant 25 : index
    %25 = memref.load %arg0[%c25] : memref<72xf32, #tpu.memory_space<smem>>
    %c26 = arith.constant 26 : index
    %26 = memref.load %arg0[%c26] : memref<72xf32, #tpu.memory_space<smem>>
    %c27 = arith.constant 27 : index
    %27 = memref.load %arg0[%c27] : memref<72xf32, #tpu.memory_space<smem>>
    %c28 = arith.constant 28 : index
    %28 = memref.load %arg0[%c28] : memref<72xf32, #tpu.memory_space<smem>>
    %c29 = arith.constant 29 : index
    %29 = memref.load %arg0[%c29] : memref<72xf32, #tpu.memory_space<smem>>
    %c30 = arith.constant 30 : index
    %30 = memref.load %arg0[%c30] : memref<72xf32, #tpu.memory_space<smem>>
    %c31 = arith.constant 31 : index
    %31 = memref.load %arg0[%c31] : memref<72xf32, #tpu.memory_space<smem>>
    %c32 = arith.constant 32 : index
    %32 = memref.load %arg0[%c32] : memref<72xf32, #tpu.memory_space<smem>>
    %c33 = arith.constant 33 : index
    %33 = memref.load %arg0[%c33] : memref<72xf32, #tpu.memory_space<smem>>
    %c34 = arith.constant 34 : index
    %34 = memref.load %arg0[%c34] : memref<72xf32, #tpu.memory_space<smem>>
    %c35 = arith.constant 35 : index
    %35 = memref.load %arg0[%c35] : memref<72xf32, #tpu.memory_space<smem>>
    %c36 = arith.constant 36 : index
    %36 = memref.load %arg0[%c36] : memref<72xf32, #tpu.memory_space<smem>>
    %c37 = arith.constant 37 : index
    %37 = memref.load %arg0[%c37] : memref<72xf32, #tpu.memory_space<smem>>
    %c38 = arith.constant 38 : index
    %38 = memref.load %arg0[%c38] : memref<72xf32, #tpu.memory_space<smem>>
    %c39 = arith.constant 39 : index
    %39 = memref.load %arg0[%c39] : memref<72xf32, #tpu.memory_space<smem>>
    %c40 = arith.constant 40 : index
    %40 = memref.load %arg0[%c40] : memref<72xf32, #tpu.memory_space<smem>>
    %c41 = arith.constant 41 : index
    %41 = memref.load %arg0[%c41] : memref<72xf32, #tpu.memory_space<smem>>
    %c42 = arith.constant 42 : index
    %42 = memref.load %arg0[%c42] : memref<72xf32, #tpu.memory_space<smem>>
    %c43 = arith.constant 43 : index
    %43 = memref.load %arg0[%c43] : memref<72xf32, #tpu.memory_space<smem>>
    %c44 = arith.constant 44 : index
    %44 = memref.load %arg0[%c44] : memref<72xf32, #tpu.memory_space<smem>>
    %c45 = arith.constant 45 : index
    %45 = memref.load %arg0[%c45] : memref<72xf32, #tpu.memory_space<smem>>
    %c46 = arith.constant 46 : index
    %46 = memref.load %arg0[%c46] : memref<72xf32, #tpu.memory_space<smem>>
    %c47 = arith.constant 47 : index
    %47 = memref.load %arg0[%c47] : memref<72xf32, #tpu.memory_space<smem>>
    %c48 = arith.constant 48 : index
    %48 = memref.load %arg0[%c48] : memref<72xf32, #tpu.memory_space<smem>>
    %c49 = arith.constant 49 : index
    %49 = memref.load %arg0[%c49] : memref<72xf32, #tpu.memory_space<smem>>
    %c50 = arith.constant 50 : index
    %50 = memref.load %arg0[%c50] : memref<72xf32, #tpu.memory_space<smem>>
    %c51 = arith.constant 51 : index
    %51 = memref.load %arg0[%c51] : memref<72xf32, #tpu.memory_space<smem>>
    %c52 = arith.constant 52 : index
    %52 = memref.load %arg0[%c52] : memref<72xf32, #tpu.memory_space<smem>>
    %c53 = arith.constant 53 : index
    %53 = memref.load %arg0[%c53] : memref<72xf32, #tpu.memory_space<smem>>
    %c54 = arith.constant 54 : index
    %54 = memref.load %arg0[%c54] : memref<72xf32, #tpu.memory_space<smem>>
    %c55 = arith.constant 55 : index
    %55 = memref.load %arg0[%c55] : memref<72xf32, #tpu.memory_space<smem>>
    %c56 = arith.constant 56 : index
    %56 = memref.load %arg0[%c56] : memref<72xf32, #tpu.memory_space<smem>>
    %c57 = arith.constant 57 : index
    %57 = memref.load %arg0[%c57] : memref<72xf32, #tpu.memory_space<smem>>
    %c58 = arith.constant 58 : index
    %58 = memref.load %arg0[%c58] : memref<72xf32, #tpu.memory_space<smem>>
    %c59 = arith.constant 59 : index
    %59 = memref.load %arg0[%c59] : memref<72xf32, #tpu.memory_space<smem>>
    %c60 = arith.constant 60 : index
    %60 = memref.load %arg0[%c60] : memref<72xf32, #tpu.memory_space<smem>>
    %c61 = arith.constant 61 : index
    %61 = memref.load %arg0[%c61] : memref<72xf32, #tpu.memory_space<smem>>
    %c62 = arith.constant 62 : index
    %62 = memref.load %arg0[%c62] : memref<72xf32, #tpu.memory_space<smem>>
    %c63 = arith.constant 63 : index
    %63 = memref.load %arg0[%c63] : memref<72xf32, #tpu.memory_space<smem>>
    %c64 = arith.constant 64 : index
    %64 = memref.load %arg0[%c64] : memref<72xf32, #tpu.memory_space<smem>>
    %c65 = arith.constant 65 : index
    %65 = memref.load %arg0[%c65] : memref<72xf32, #tpu.memory_space<smem>>
    %c66 = arith.constant 66 : index
    %66 = memref.load %arg0[%c66] : memref<72xf32, #tpu.memory_space<smem>>
    %c67 = arith.constant 67 : index
    %67 = memref.load %arg0[%c67] : memref<72xf32, #tpu.memory_space<smem>>
    %c68 = arith.constant 68 : index
    %68 = memref.load %arg0[%c68] : memref<72xf32, #tpu.memory_space<smem>>
    %c69 = arith.constant 69 : index
    %69 = memref.load %arg0[%c69] : memref<72xf32, #tpu.memory_space<smem>>
    %c70 = arith.constant 70 : index
    %70 = memref.load %arg0[%c70] : memref<72xf32, #tpu.memory_space<smem>>
    %c71 = arith.constant 71 : index
    %71 = memref.load %arg0[%c71] : memref<72xf32, #tpu.memory_space<smem>>
    %c0_0 = arith.constant 0 : index
    %72 = memref.load %arg1[%c0_0] : memref<8xf32, #tpu.memory_space<smem>>
    %c1_1 = arith.constant 1 : index
    %73 = memref.load %arg1[%c1_1] : memref<8xf32, #tpu.memory_space<smem>>
    %c2_2 = arith.constant 2 : index
    %74 = memref.load %arg1[%c2_2] : memref<8xf32, #tpu.memory_space<smem>>
    %c3_3 = arith.constant 3 : index
    %75 = memref.load %arg1[%c3_3] : memref<8xf32, #tpu.memory_space<smem>>
    %c4_4 = arith.constant 4 : index
    %76 = memref.load %arg1[%c4_4] : memref<8xf32, #tpu.memory_space<smem>>
    %c5_5 = arith.constant 5 : index
    %77 = memref.load %arg1[%c5_5] : memref<8xf32, #tpu.memory_space<smem>>
    %c6_6 = arith.constant 6 : index
    %78 = memref.load %arg1[%c6_6] : memref<8xf32, #tpu.memory_space<smem>>
    %c7_7 = arith.constant 7 : index
    %79 = memref.load %arg1[%c7_7] : memref<8xf32, #tpu.memory_space<smem>>
    %80 = tpu.iota {dimensions = array<i32: 0>} : vector<16x128xi32>
    %81 = tpu.iota {dimensions = array<i32: 1>} : vector<16x128xi32>
    %c0_i32 = arith.constant 0 : i32
    %82 = vector.broadcast %c0_i32 : i32 to vector<16x128xi32>
    %83 = arith.cmpi eq, %80, %82 : vector<16x128xi32>
    %c15_i32 = arith.constant 15 : i32
    %84 = vector.broadcast %c15_i32 : i32 to vector<16x128xi32>
    %85 = arith.cmpi eq, %80, %84 : vector<16x128xi32>
    %c0_i32_8 = arith.constant 0 : i32
    %86 = vector.broadcast %c0_i32_8 : i32 to vector<16x128xi32>
    %87 = arith.cmpi eq, %81, %86 : vector<16x128xi32>
    %c127_i32 = arith.constant 127 : i32
    %88 = vector.broadcast %c127_i32 : i32 to vector<16x128xi32>
    %89 = arith.cmpi eq, %81, %88 : vector<16x128xi32>
    %c0_9 = arith.constant 0 : index
    %c0_10 = arith.constant 0 : index
    %c0_11 = arith.constant 0 : index
    %c0_12 = arith.constant 0 : index
    %90 = vector.load %arg3[%c0_9, %c0_10, %c0_11, %c0_12] : memref<2x1x16x128xf32, #tpu.memory_space<vmem>>, vector<1x1x16x128xf32>
    %91 = vector.shape_cast %90 : vector<1x1x16x128xf32> to vector<16x128xf32>
    %c1_i32 = arith.constant 1 : i32
    %92 = tpu.dynamic_rotate %91 by %c1_i32 dim 0 : vector<16x128xf32>, i32 -> vector<16x128xf32>
    %93 = arith.select %83, %91, %92 : vector<16x128xi1>, vector<16x128xf32>
    %c15_i32_13 = arith.constant 15 : i32
    %94 = tpu.dynamic_rotate %91 by %c15_i32_13 dim 0 : vector<16x128xf32>, i32 -> vector<16x128xf32>
    %95 = arith.select %85, %91, %94 : vector<16x128xi1>, vector<16x128xf32>
    %c1_i32_14 = arith.constant 1 : i32
    %96 = tpu.dynamic_rotate %93 by %c1_i32_14 dim 1 : vector<16x128xf32>, i32 -> vector<16x128xf32>
    %97 = arith.select %87, %93, %96 : vector<16x128xi1>, vector<16x128xf32>
    %c127_i32_15 = arith.constant 127 : i32
    %98 = tpu.dynamic_rotate %93 by %c127_i32_15 dim 1 : vector<16x128xf32>, i32 -> vector<16x128xf32>
    %99 = arith.select %89, %93, %98 : vector<16x128xi1>, vector<16x128xf32>
    %c1_i32_16 = arith.constant 1 : i32
    %100 = tpu.dynamic_rotate %91 by %c1_i32_16 dim 1 : vector<16x128xf32>, i32 -> vector<16x128xf32>
    %101 = arith.select %87, %91, %100 : vector<16x128xi1>, vector<16x128xf32>
    %c127_i32_17 = arith.constant 127 : i32
    %102 = tpu.dynamic_rotate %91 by %c127_i32_17 dim 1 : vector<16x128xf32>, i32 -> vector<16x128xf32>
    %103 = arith.select %89, %91, %102 : vector<16x128xi1>, vector<16x128xf32>
    %c1_i32_18 = arith.constant 1 : i32
    %104 = tpu.dynamic_rotate %95 by %c1_i32_18 dim 1 : vector<16x128xf32>, i32 -> vector<16x128xf32>
    %105 = arith.select %87, %95, %104 : vector<16x128xi1>, vector<16x128xf32>
    %c127_i32_19 = arith.constant 127 : i32
    %106 = tpu.dynamic_rotate %95 by %c127_i32_19 dim 1 : vector<16x128xf32>, i32 -> vector<16x128xf32>
    %107 = arith.select %89, %95, %106 : vector<16x128xi1>, vector<16x128xf32>
    %108 = vector.broadcast %0 : f32 to vector<16x128xf32>
    %109 = arith.mulf %97, %108 : vector<16x128xf32>
    %110 = vector.broadcast %72 : f32 to vector<16x128xf32>
    %111 = arith.addf %110, %109 : vector<16x128xf32>
    %112 = vector.broadcast %1 : f32 to vector<16x128xf32>
    %113 = arith.mulf %93, %112 : vector<16x128xf32>
    %114 = arith.addf %111, %113 : vector<16x128xf32>
    %115 = vector.broadcast %2 : f32 to vector<16x128xf32>
    %116 = arith.mulf %99, %115 : vector<16x128xf32>
    %117 = arith.addf %114, %116 : vector<16x128xf32>
    %118 = vector.broadcast %3 : f32 to vector<16x128xf32>
    %119 = arith.mulf %101, %118 : vector<16x128xf32>
    %120 = arith.addf %117, %119 : vector<16x128xf32>
    %121 = vector.broadcast %4 : f32 to vector<16x128xf32>
    %122 = arith.mulf %91, %121 : vector<16x128xf32>
    %123 = arith.addf %120, %122 : vector<16x128xf32>
    %124 = vector.broadcast %5 : f32 to vector<16x128xf32>
    %125 = arith.mulf %103, %124 : vector<16x128xf32>
    %126 = arith.addf %123, %125 : vector<16x128xf32>
    %127 = vector.broadcast %6 : f32 to vector<16x128xf32>
    %128 = arith.mulf %105, %127 : vector<16x128xf32>
    %129 = arith.addf %126, %128 : vector<16x128xf32>
    %130 = vector.broadcast %7 : f32 to vector<16x128xf32>
    %131 = arith.mulf %95, %130 : vector<16x128xf32>
    %132 = arith.addf %129, %131 : vector<16x128xf32>
    %133 = vector.broadcast %8 : f32 to vector<16x128xf32>
    %134 = arith.mulf %107, %133 : vector<16x128xf32>
    %135 = arith.addf %132, %134 : vector<16x128xf32>
    %136 = math.tanh %135 : vector<16x128xf32>
    %137 = vector.broadcast %9 : f32 to vector<16x128xf32>
    %138 = arith.mulf %97, %137 : vector<16x128xf32>
    %139 = vector.broadcast %73 : f32 to vector<16x128xf32>
    %140 = arith.addf %139, %138 : vector<16x128xf32>
    %141 = vector.broadcast %10 : f32 to vector<16x128xf32>
    %142 = arith.mulf %93, %141 : vector<16x128xf32>
    %143 = arith.addf %140, %142 : vector<16x128xf32>
    %144 = vector.broadcast %11 : f32 to vector<16x128xf32>
    %145 = arith.mulf %99, %144 : vector<16x128xf32>
    %146 = arith.addf %143, %145 : vector<16x128xf32>
    %147 = vector.broadcast %12 : f32 to vector<16x128xf32>
    %148 = arith.mulf %101, %147 : vector<16x128xf32>
    %149 = arith.addf %146, %148 : vector<16x128xf32>
    %150 = vector.broadcast %13 : f32 to vector<16x128xf32>
    %151 = arith.mulf %91, %150 : vector<16x128xf32>
    %152 = arith.addf %149, %151 : vector<16x128xf32>
    %153 = vector.broadcast %14 : f32 to vector<16x128xf32>
    %154 = arith.mulf %103, %153 : vector<16x128xf32>
    %155 = arith.addf %152, %154 : vector<16x128xf32>
    %156 = vector.broadcast %15 : f32 to vector<16x128xf32>
    %157 = arith.mulf %105, %156 : vector<16x128xf32>
    %158 = arith.addf %155, %157 : vector<16x128xf32>
    %159 = vector.broadcast %16 : f32 to vector<16x128xf32>
    %160 = arith.mulf %95, %159 : vector<16x128xf32>
    %161 = arith.addf %158, %160 : vector<16x128xf32>
    %162 = vector.broadcast %17 : f32 to vector<16x128xf32>
    %163 = arith.mulf %107, %162 : vector<16x128xf32>
    %164 = arith.addf %161, %163 : vector<16x128xf32>
    %165 = math.tanh %164 : vector<16x128xf32>
    %166 = vector.broadcast %18 : f32 to vector<16x128xf32>
    %167 = arith.mulf %97, %166 : vector<16x128xf32>
    %168 = vector.broadcast %74 : f32 to vector<16x128xf32>
    %169 = arith.addf %168, %167 : vector<16x128xf32>
    %170 = vector.broadcast %19 : f32 to vector<16x128xf32>
    %171 = arith.mulf %93, %170 : vector<16x128xf32>
    %172 = arith.addf %169, %171 : vector<16x128xf32>
    %173 = vector.broadcast %20 : f32 to vector<16x128xf32>
    %174 = arith.mulf %99, %173 : vector<16x128xf32>
    %175 = arith.addf %172, %174 : vector<16x128xf32>
    %176 = vector.broadcast %21 : f32 to vector<16x128xf32>
    %177 = arith.mulf %101, %176 : vector<16x128xf32>
    %178 = arith.addf %175, %177 : vector<16x128xf32>
    %179 = vector.broadcast %22 : f32 to vector<16x128xf32>
    %180 = arith.mulf %91, %179 : vector<16x128xf32>
    %181 = arith.addf %178, %180 : vector<16x128xf32>
    %182 = vector.broadcast %23 : f32 to vector<16x128xf32>
    %183 = arith.mulf %103, %182 : vector<16x128xf32>
    %184 = arith.addf %181, %183 : vector<16x128xf32>
    %185 = vector.broadcast %24 : f32 to vector<16x128xf32>
    %186 = arith.mulf %105, %185 : vector<16x128xf32>
    %187 = arith.addf %184, %186 : vector<16x128xf32>
    %188 = vector.broadcast %25 : f32 to vector<16x128xf32>
    %189 = arith.mulf %95, %188 : vector<16x128xf32>
    %190 = arith.addf %187, %189 : vector<16x128xf32>
    %191 = vector.broadcast %26 : f32 to vector<16x128xf32>
    %192 = arith.mulf %107, %191 : vector<16x128xf32>
    %193 = arith.addf %190, %192 : vector<16x128xf32>
    %194 = math.tanh %193 : vector<16x128xf32>
    %195 = vector.broadcast %27 : f32 to vector<16x128xf32>
    %196 = arith.mulf %97, %195 : vector<16x128xf32>
    %197 = vector.broadcast %75 : f32 to vector<16x128xf32>
    %198 = arith.addf %197, %196 : vector<16x128xf32>
    %199 = vector.broadcast %28 : f32 to vector<16x128xf32>
    %200 = arith.mulf %93, %199 : vector<16x128xf32>
    %201 = arith.addf %198, %200 : vector<16x128xf32>
    %202 = vector.broadcast %29 : f32 to vector<16x128xf32>
    %203 = arith.mulf %99, %202 : vector<16x128xf32>
    %204 = arith.addf %201, %203 : vector<16x128xf32>
    %205 = vector.broadcast %30 : f32 to vector<16x128xf32>
    %206 = arith.mulf %101, %205 : vector<16x128xf32>
    %207 = arith.addf %204, %206 : vector<16x128xf32>
    %208 = vector.broadcast %31 : f32 to vector<16x128xf32>
    %209 = arith.mulf %91, %208 : vector<16x128xf32>
    %210 = arith.addf %207, %209 : vector<16x128xf32>
    %211 = vector.broadcast %32 : f32 to vector<16x128xf32>
    %212 = arith.mulf %103, %211 : vector<16x128xf32>
    %213 = arith.addf %210, %212 : vector<16x128xf32>
    %214 = vector.broadcast %33 : f32 to vector<16x128xf32>
    %215 = arith.mulf %105, %214 : vector<16x128xf32>
    %216 = arith.addf %213, %215 : vector<16x128xf32>
    %217 = vector.broadcast %34 : f32 to vector<16x128xf32>
    %218 = arith.mulf %95, %217 : vector<16x128xf32>
    %219 = arith.addf %216, %218 : vector<16x128xf32>
    %220 = vector.broadcast %35 : f32 to vector<16x128xf32>
    %221 = arith.mulf %107, %220 : vector<16x128xf32>
    %222 = arith.addf %219, %221 : vector<16x128xf32>
    %223 = math.tanh %222 : vector<16x128xf32>
    %224 = vector.broadcast %36 : f32 to vector<16x128xf32>
    %225 = arith.mulf %97, %224 : vector<16x128xf32>
    %226 = vector.broadcast %76 : f32 to vector<16x128xf32>
    %227 = arith.addf %226, %225 : vector<16x128xf32>
    %228 = vector.broadcast %37 : f32 to vector<16x128xf32>
    %229 = arith.mulf %93, %228 : vector<16x128xf32>
    %230 = arith.addf %227, %229 : vector<16x128xf32>
    %231 = vector.broadcast %38 : f32 to vector<16x128xf32>
    %232 = arith.mulf %99, %231 : vector<16x128xf32>
    %233 = arith.addf %230, %232 : vector<16x128xf32>
    %234 = vector.broadcast %39 : f32 to vector<16x128xf32>
    %235 = arith.mulf %101, %234 : vector<16x128xf32>
    %236 = arith.addf %233, %235 : vector<16x128xf32>
    %237 = vector.broadcast %40 : f32 to vector<16x128xf32>
    %238 = arith.mulf %91, %237 : vector<16x128xf32>
    %239 = arith.addf %236, %238 : vector<16x128xf32>
    %240 = vector.broadcast %41 : f32 to vector<16x128xf32>
    %241 = arith.mulf %103, %240 : vector<16x128xf32>
    %242 = arith.addf %239, %241 : vector<16x128xf32>
    %243 = vector.broadcast %42 : f32 to vector<16x128xf32>
    %244 = arith.mulf %105, %243 : vector<16x128xf32>
    %245 = arith.addf %242, %244 : vector<16x128xf32>
    %246 = vector.broadcast %43 : f32 to vector<16x128xf32>
    %247 = arith.mulf %95, %246 : vector<16x128xf32>
    %248 = arith.addf %245, %247 : vector<16x128xf32>
    %249 = vector.broadcast %44 : f32 to vector<16x128xf32>
    %250 = arith.mulf %107, %249 : vector<16x128xf32>
    %251 = arith.addf %248, %250 : vector<16x128xf32>
    %252 = math.tanh %251 : vector<16x128xf32>
    %253 = vector.broadcast %45 : f32 to vector<16x128xf32>
    %254 = arith.mulf %97, %253 : vector<16x128xf32>
    %255 = vector.broadcast %77 : f32 to vector<16x128xf32>
    %256 = arith.addf %255, %254 : vector<16x128xf32>
    %257 = vector.broadcast %46 : f32 to vector<16x128xf32>
    %258 = arith.mulf %93, %257 : vector<16x128xf32>
    %259 = arith.addf %256, %258 : vector<16x128xf32>
    %260 = vector.broadcast %47 : f32 to vector<16x128xf32>
    %261 = arith.mulf %99, %260 : vector<16x128xf32>
    %262 = arith.addf %259, %261 : vector<16x128xf32>
    %263 = vector.broadcast %48 : f32 to vector<16x128xf32>
    %264 = arith.mulf %101, %263 : vector<16x128xf32>
    %265 = arith.addf %262, %264 : vector<16x128xf32>
    %266 = vector.broadcast %49 : f32 to vector<16x128xf32>
    %267 = arith.mulf %91, %266 : vector<16x128xf32>
    %268 = arith.addf %265, %267 : vector<16x128xf32>
    %269 = vector.broadcast %50 : f32 to vector<16x128xf32>
    %270 = arith.mulf %103, %269 : vector<16x128xf32>
    %271 = arith.addf %268, %270 : vector<16x128xf32>
    %272 = vector.broadcast %51 : f32 to vector<16x128xf32>
    %273 = arith.mulf %105, %272 : vector<16x128xf32>
    %274 = arith.addf %271, %273 : vector<16x128xf32>
    %275 = vector.broadcast %52 : f32 to vector<16x128xf32>
    %276 = arith.mulf %95, %275 : vector<16x128xf32>
    %277 = arith.addf %274, %276 : vector<16x128xf32>
    %278 = vector.broadcast %53 : f32 to vector<16x128xf32>
    %279 = arith.mulf %107, %278 : vector<16x128xf32>
    %280 = arith.addf %277, %279 : vector<16x128xf32>
    %281 = math.tanh %280 : vector<16x128xf32>
    %282 = vector.broadcast %54 : f32 to vector<16x128xf32>
    %283 = arith.mulf %97, %282 : vector<16x128xf32>
    %284 = vector.broadcast %78 : f32 to vector<16x128xf32>
    %285 = arith.addf %284, %283 : vector<16x128xf32>
    %286 = vector.broadcast %55 : f32 to vector<16x128xf32>
    %287 = arith.mulf %93, %286 : vector<16x128xf32>
    %288 = arith.addf %285, %287 : vector<16x128xf32>
    %289 = vector.broadcast %56 : f32 to vector<16x128xf32>
    %290 = arith.mulf %99, %289 : vector<16x128xf32>
    %291 = arith.addf %288, %290 : vector<16x128xf32>
    %292 = vector.broadcast %57 : f32 to vector<16x128xf32>
    %293 = arith.mulf %101, %292 : vector<16x128xf32>
    %294 = arith.addf %291, %293 : vector<16x128xf32>
    %295 = vector.broadcast %58 : f32 to vector<16x128xf32>
    %296 = arith.mulf %91, %295 : vector<16x128xf32>
    %297 = arith.addf %294, %296 : vector<16x128xf32>
    %298 = vector.broadcast %59 : f32 to vector<16x128xf32>
    %299 = arith.mulf %103, %298 : vector<16x128xf32>
    %300 = arith.addf %297, %299 : vector<16x128xf32>
    %301 = vector.broadcast %60 : f32 to vector<16x128xf32>
    %302 = arith.mulf %105, %301 : vector<16x128xf32>
    %303 = arith.addf %300, %302 : vector<16x128xf32>
    %304 = vector.broadcast %61 : f32 to vector<16x128xf32>
    %305 = arith.mulf %95, %304 : vector<16x128xf32>
    %306 = arith.addf %303, %305 : vector<16x128xf32>
    %307 = vector.broadcast %62 : f32 to vector<16x128xf32>
    %308 = arith.mulf %107, %307 : vector<16x128xf32>
    %309 = arith.addf %306, %308 : vector<16x128xf32>
    %310 = math.tanh %309 : vector<16x128xf32>
    %311 = vector.broadcast %63 : f32 to vector<16x128xf32>
    %312 = arith.mulf %97, %311 : vector<16x128xf32>
    %313 = vector.broadcast %79 : f32 to vector<16x128xf32>
    %314 = arith.addf %313, %312 : vector<16x128xf32>
    %315 = vector.broadcast %64 : f32 to vector<16x128xf32>
    %316 = arith.mulf %93, %315 : vector<16x128xf32>
    %317 = arith.addf %314, %316 : vector<16x128xf32>
    %318 = vector.broadcast %65 : f32 to vector<16x128xf32>
    %319 = arith.mulf %99, %318 : vector<16x128xf32>
    %320 = arith.addf %317, %319 : vector<16x128xf32>
    %321 = vector.broadcast %66 : f32 to vector<16x128xf32>
    %322 = arith.mulf %101, %321 : vector<16x128xf32>
    %323 = arith.addf %320, %322 : vector<16x128xf32>
    %324 = vector.broadcast %67 : f32 to vector<16x128xf32>
    %325 = arith.mulf %91, %324 : vector<16x128xf32>
    %326 = arith.addf %323, %325 : vector<16x128xf32>
    %327 = vector.broadcast %68 : f32 to vector<16x128xf32>
    %328 = arith.mulf %103, %327 : vector<16x128xf32>
    %329 = arith.addf %326, %328 : vector<16x128xf32>
    %330 = vector.broadcast %69 : f32 to vector<16x128xf32>
    %331 = arith.mulf %105, %330 : vector<16x128xf32>
    %332 = arith.addf %329, %331 : vector<16x128xf32>
    %333 = vector.broadcast %70 : f32 to vector<16x128xf32>
    %334 = arith.mulf %95, %333 : vector<16x128xf32>
    %335 = arith.addf %332, %334 : vector<16x128xf32>
    %336 = vector.broadcast %71 : f32 to vector<16x128xf32>
    %337 = arith.mulf %107, %336 : vector<16x128xf32>
    %338 = arith.addf %335, %337 : vector<16x128xf32>
    %339 = math.tanh %338 : vector<16x128xf32>
    %c0_20 = arith.constant 0 : index
    %c0_21 = arith.constant 0 : index
    %c0_22 = arith.constant 0 : index
    %c0_23 = arith.constant 0 : index
    %340 = vector.load %arg2[%c0_20, %c0_21, %c0_22, %c0_23] : memref<2x1x16x128xf32, #tpu.memory_space<vmem>>, vector<1x1x16x128xf32>
    %341 = vector.shape_cast %340 : vector<1x1x16x128xf32> to vector<16x128xf32>
    %342 = arith.mulf %341, %341 : vector<16x128xf32>
    %343 = arith.subf %342, %341 : vector<16x128xf32>
    %344 = arith.mulf %136, %343 : vector<16x128xf32>
    %345 = arith.subf %341, %344 : vector<16x128xf32>
    %346 = arith.mulf %345, %345 : vector<16x128xf32>
    %347 = arith.subf %346, %345 : vector<16x128xf32>
    %348 = arith.mulf %165, %347 : vector<16x128xf32>
    %349 = arith.subf %345, %348 : vector<16x128xf32>
    %350 = arith.mulf %349, %349 : vector<16x128xf32>
    %351 = arith.subf %350, %349 : vector<16x128xf32>
    %352 = arith.mulf %194, %351 : vector<16x128xf32>
    %353 = arith.subf %349, %352 : vector<16x128xf32>
    %354 = arith.mulf %353, %353 : vector<16x128xf32>
    %355 = arith.subf %354, %353 : vector<16x128xf32>
    %356 = arith.mulf %223, %355 : vector<16x128xf32>
    %357 = arith.subf %353, %356 : vector<16x128xf32>
    %358 = arith.mulf %357, %357 : vector<16x128xf32>
    %359 = arith.subf %358, %357 : vector<16x128xf32>
    %360 = arith.mulf %252, %359 : vector<16x128xf32>
    %361 = arith.subf %357, %360 : vector<16x128xf32>
    %362 = arith.mulf %361, %361 : vector<16x128xf32>
    %363 = arith.subf %362, %361 : vector<16x128xf32>
    %364 = arith.mulf %281, %363 : vector<16x128xf32>
    %365 = arith.subf %361, %364 : vector<16x128xf32>
    %366 = arith.mulf %365, %365 : vector<16x128xf32>
    %367 = arith.subf %366, %365 : vector<16x128xf32>
    %368 = arith.mulf %310, %367 : vector<16x128xf32>
    %369 = arith.subf %365, %368 : vector<16x128xf32>
    %370 = arith.mulf %369, %369 : vector<16x128xf32>
    %371 = arith.subf %370, %369 : vector<16x128xf32>
    %372 = arith.mulf %339, %371 : vector<16x128xf32>
    %373 = arith.subf %369, %372 : vector<16x128xf32>
    %cst = arith.constant 0.000000e+00 : f32
    %cst_24 = arith.constant 1.000000e+00 : f32
    %374 = vector.broadcast %cst : f32 to vector<16x128xf32>
    %375 = arith.maximumf %374, %373 : vector<16x128xf32>
    %376 = vector.broadcast %cst_24 : f32 to vector<16x128xf32>
    %377 = arith.minimumf %376, %375 : vector<16x128xf32>
    %c0_25 = arith.constant 0 : index
    %c0_26 = arith.constant 0 : index
    %c0_27 = arith.constant 0 : index
    %c0_28 = arith.constant 0 : index
    %378 = vector.load %arg4[%c0_25, %c0_26, %c0_27, %c0_28] : memref<2x1x16x128xf32, #tpu.memory_space<vmem>>, vector<1x1x16x128xf32>
    %379 = vector.shape_cast %378 : vector<1x1x16x128xf32> to vector<16x128xf32>
    %380 = vector.shape_cast %377 : vector<16x128xf32> to vector<1x1x16x128xf32>
    tpu.vector_store %arg4[%c0_25, %c0_26, %c0_27, %c0_28], %380 {strides = array<i32>} : memref<2x1x16x128xf32, #tpu.memory_space<vmem>>, vector<1x1x16x128xf32>,
    %c1_29 = arith.constant 1 : index
    %c0_30 = arith.constant 0 : index
    %c0_31 = arith.constant 0 : index
    %c0_32 = arith.constant 0 : index
    %381 = vector.load %arg3[%c1_29, %c0_30, %c0_31, %c0_32] : memref<2x1x16x128xf32, #tpu.memory_space<vmem>>, vector<1x1x16x128xf32>
    %382 = vector.shape_cast %381 : vector<1x1x16x128xf32> to vector<16x128xf32>
    %c1_i32_33 = arith.constant 1 : i32
    %383 = tpu.dynamic_rotate %382 by %c1_i32_33 dim 0 : vector<16x128xf32>, i32 -> vector<16x128xf32>
    %384 = arith.select %83, %382, %383 : vector<16x128xi1>, vector<16x128xf32>
    %c15_i32_34 = arith.constant 15 : i32
    %385 = tpu.dynamic_rotate %382 by %c15_i32_34 dim 0 : vector<16x128xf32>, i32 -> vector<16x128xf32>
    %386 = arith.select %85, %382, %385 : vector<16x128xi1>, vector<16x128xf32>
    %c1_i32_35 = arith.constant 1 : i32
    %387 = tpu.dynamic_rotate %384 by %c1_i32_35 dim 1 : vector<16x128xf32>, i32 -> vector<16x128xf32>
    %388 = arith.select %87, %384, %387 : vector<16x128xi1>, vector<16x128xf32>
    %c127_i32_36 = arith.constant 127 : i32
    %389 = tpu.dynamic_rotate %384 by %c127_i32_36 dim 1 : vector<16x128xf32>, i32 -> vector<16x128xf32>
    %390 = arith.select %89, %384, %389 : vector<16x128xi1>, vector<16x128xf32>
    %c1_i32_37 = arith.constant 1 : i32
    %391 = tpu.dynamic_rotate %382 by %c1_i32_37 dim 1 : vector<16x128xf32>, i32 -> vector<16x128xf32>
    %392 = arith.select %87, %382, %391 : vector<16x128xi1>, vector<16x128xf32>
    %c127_i32_38 = arith.constant 127 : i32
    %393 = tpu.dynamic_rotate %382 by %c127_i32_38 dim 1 : vector<16x128xf32>, i32 -> vector<16x128xf32>
    %394 = arith.select %89, %382, %393 : vector<16x128xi1>, vector<16x128xf32>
    %c1_i32_39 = arith.constant 1 : i32
    %395 = tpu.dynamic_rotate %386 by %c1_i32_39 dim 1 : vector<16x128xf32>, i32 -> vector<16x128xf32>
    %396 = arith.select %87, %386, %395 : vector<16x128xi1>, vector<16x128xf32>
    %c127_i32_40 = arith.constant 127 : i32
    %397 = tpu.dynamic_rotate %386 by %c127_i32_40 dim 1 : vector<16x128xf32>, i32 -> vector<16x128xf32>
    %398 = arith.select %89, %386, %397 : vector<16x128xi1>, vector<16x128xf32>
    %399 = vector.broadcast %0 : f32 to vector<16x128xf32>
    %400 = arith.mulf %388, %399 : vector<16x128xf32>
    %401 = vector.broadcast %72 : f32 to vector<16x128xf32>
    %402 = arith.addf %401, %400 : vector<16x128xf32>
    %403 = vector.broadcast %1 : f32 to vector<16x128xf32>
    %404 = arith.mulf %384, %403 : vector<16x128xf32>
    %405 = arith.addf %402, %404 : vector<16x128xf32>
    %406 = vector.broadcast %2 : f32 to vector<16x128xf32>
    %407 = arith.mulf %390, %406 : vector<16x128xf32>
    %408 = arith.addf %405, %407 : vector<16x128xf32>
    %409 = vector.broadcast %3 : f32 to vector<16x128xf32>
    %410 = arith.mulf %392, %409 : vector<16x128xf32>
    %411 = arith.addf %408, %410 : vector<16x128xf32>
    %412 = vector.broadcast %4 : f32 to vector<16x128xf32>
    %413 = arith.mulf %382, %412 : vector<16x128xf32>
    %414 = arith.addf %411, %413 : vector<16x128xf32>
    %415 = vector.broadcast %5 : f32 to vector<16x128xf32>
    %416 = arith.mulf %394, %415 : vector<16x128xf32>
    %417 = arith.addf %414, %416 : vector<16x128xf32>
    %418 = vector.broadcast %6 : f32 to vector<16x128xf32>
    %419 = arith.mulf %396, %418 : vector<16x128xf32>
    %420 = arith.addf %417, %419 : vector<16x128xf32>
    %421 = vector.broadcast %7 : f32 to vector<16x128xf32>
    %422 = arith.mulf %386, %421 : vector<16x128xf32>
    %423 = arith.addf %420, %422 : vector<16x128xf32>
    %424 = vector.broadcast %8 : f32 to vector<16x128xf32>
    %425 = arith.mulf %398, %424 : vector<16x128xf32>
    %426 = arith.addf %423, %425 : vector<16x128xf32>
    %427 = math.tanh %426 : vector<16x128xf32>
    %428 = vector.broadcast %9 : f32 to vector<16x128xf32>
    %429 = arith.mulf %388, %428 : vector<16x128xf32>
    %430 = vector.broadcast %73 : f32 to vector<16x128xf32>
    %431 = arith.addf %430, %429 : vector<16x128xf32>
    %432 = vector.broadcast %10 : f32 to vector<16x128xf32>
    %433 = arith.mulf %384, %432 : vector<16x128xf32>
    %434 = arith.addf %431, %433 : vector<16x128xf32>
    %435 = vector.broadcast %11 : f32 to vector<16x128xf32>
    %436 = arith.mulf %390, %435 : vector<16x128xf32>
    %437 = arith.addf %434, %436 : vector<16x128xf32>
    %438 = vector.broadcast %12 : f32 to vector<16x128xf32>
    %439 = arith.mulf %392, %438 : vector<16x128xf32>
    %440 = arith.addf %437, %439 : vector<16x128xf32>
    %441 = vector.broadcast %13 : f32 to vector<16x128xf32>
    %442 = arith.mulf %382, %441 : vector<16x128xf32>
    %443 = arith.addf %440, %442 : vector<16x128xf32>
    %444 = vector.broadcast %14 : f32 to vector<16x128xf32>
    %445 = arith.mulf %394, %444 : vector<16x128xf32>
    %446 = arith.addf %443, %445 : vector<16x128xf32>
    %447 = vector.broadcast %15 : f32 to vector<16x128xf32>
    %448 = arith.mulf %396, %447 : vector<16x128xf32>
    %449 = arith.addf %446, %448 : vector<16x128xf32>
    %450 = vector.broadcast %16 : f32 to vector<16x128xf32>
    %451 = arith.mulf %386, %450 : vector<16x128xf32>
    %452 = arith.addf %449, %451 : vector<16x128xf32>
    %453 = vector.broadcast %17 : f32 to vector<16x128xf32>
    %454 = arith.mulf %398, %453 : vector<16x128xf32>
    %455 = arith.addf %452, %454 : vector<16x128xf32>
    %456 = math.tanh %455 : vector<16x128xf32>
    %457 = vector.broadcast %18 : f32 to vector<16x128xf32>
    %458 = arith.mulf %388, %457 : vector<16x128xf32>
    %459 = vector.broadcast %74 : f32 to vector<16x128xf32>
    %460 = arith.addf %459, %458 : vector<16x128xf32>
    %461 = vector.broadcast %19 : f32 to vector<16x128xf32>
    %462 = arith.mulf %384, %461 : vector<16x128xf32>
    %463 = arith.addf %460, %462 : vector<16x128xf32>
    %464 = vector.broadcast %20 : f32 to vector<16x128xf32>
    %465 = arith.mulf %390, %464 : vector<16x128xf32>
    %466 = arith.addf %463, %465 : vector<16x128xf32>
    %467 = vector.broadcast %21 : f32 to vector<16x128xf32>
    %468 = arith.mulf %392, %467 : vector<16x128xf32>
    %469 = arith.addf %466, %468 : vector<16x128xf32>
    %470 = vector.broadcast %22 : f32 to vector<16x128xf32>
    %471 = arith.mulf %382, %470 : vector<16x128xf32>
    %472 = arith.addf %469, %471 : vector<16x128xf32>
    %473 = vector.broadcast %23 : f32 to vector<16x128xf32>
    %474 = arith.mulf %394, %473 : vector<16x128xf32>
    %475 = arith.addf %472, %474 : vector<16x128xf32>
    %476 = vector.broadcast %24 : f32 to vector<16x128xf32>
    %477 = arith.mulf %396, %476 : vector<16x128xf32>
    %478 = arith.addf %475, %477 : vector<16x128xf32>
    %479 = vector.broadcast %25 : f32 to vector<16x128xf32>
    %480 = arith.mulf %386, %479 : vector<16x128xf32>
    %481 = arith.addf %478, %480 : vector<16x128xf32>
    %482 = vector.broadcast %26 : f32 to vector<16x128xf32>
    %483 = arith.mulf %398, %482 : vector<16x128xf32>
    %484 = arith.addf %481, %483 : vector<16x128xf32>
    %485 = math.tanh %484 : vector<16x128xf32>
    %486 = vector.broadcast %27 : f32 to vector<16x128xf32>
    %487 = arith.mulf %388, %486 : vector<16x128xf32>
    %488 = vector.broadcast %75 : f32 to vector<16x128xf32>
    %489 = arith.addf %488, %487 : vector<16x128xf32>
    %490 = vector.broadcast %28 : f32 to vector<16x128xf32>
    %491 = arith.mulf %384, %490 : vector<16x128xf32>
    %492 = arith.addf %489, %491 : vector<16x128xf32>
    %493 = vector.broadcast %29 : f32 to vector<16x128xf32>
    %494 = arith.mulf %390, %493 : vector<16x128xf32>
    %495 = arith.addf %492, %494 : vector<16x128xf32>
    %496 = vector.broadcast %30 : f32 to vector<16x128xf32>
    %497 = arith.mulf %392, %496 : vector<16x128xf32>
    %498 = arith.addf %495, %497 : vector<16x128xf32>
    %499 = vector.broadcast %31 : f32 to vector<16x128xf32>
    %500 = arith.mulf %382, %499 : vector<16x128xf32>
    %501 = arith.addf %498, %500 : vector<16x128xf32>
    %502 = vector.broadcast %32 : f32 to vector<16x128xf32>
    %503 = arith.mulf %394, %502 : vector<16x128xf32>
    %504 = arith.addf %501, %503 : vector<16x128xf32>
    %505 = vector.broadcast %33 : f32 to vector<16x128xf32>
    %506 = arith.mulf %396, %505 : vector<16x128xf32>
    %507 = arith.addf %504, %506 : vector<16x128xf32>
    %508 = vector.broadcast %34 : f32 to vector<16x128xf32>
    %509 = arith.mulf %386, %508 : vector<16x128xf32>
    %510 = arith.addf %507, %509 : vector<16x128xf32>
    %511 = vector.broadcast %35 : f32 to vector<16x128xf32>
    %512 = arith.mulf %398, %511 : vector<16x128xf32>
    %513 = arith.addf %510, %512 : vector<16x128xf32>
    %514 = math.tanh %513 : vector<16x128xf32>
    %515 = vector.broadcast %36 : f32 to vector<16x128xf32>
    %516 = arith.mulf %388, %515 : vector<16x128xf32>
    %517 = vector.broadcast %76 : f32 to vector<16x128xf32>
    %518 = arith.addf %517, %516 : vector<16x128xf32>
    %519 = vector.broadcast %37 : f32 to vector<16x128xf32>
    %520 = arith.mulf %384, %519 : vector<16x128xf32>
    %521 = arith.addf %518, %520 : vector<16x128xf32>
    %522 = vector.broadcast %38 : f32 to vector<16x128xf32>
    %523 = arith.mulf %390, %522 : vector<16x128xf32>
    %524 = arith.addf %521, %523 : vector<16x128xf32>
    %525 = vector.broadcast %39 : f32 to vector<16x128xf32>
    %526 = arith.mulf %392, %525 : vector<16x128xf32>
    %527 = arith.addf %524, %526 : vector<16x128xf32>
    %528 = vector.broadcast %40 : f32 to vector<16x128xf32>
    %529 = arith.mulf %382, %528 : vector<16x128xf32>
    %530 = arith.addf %527, %529 : vector<16x128xf32>
    %531 = vector.broadcast %41 : f32 to vector<16x128xf32>
    %532 = arith.mulf %394, %531 : vector<16x128xf32>
    %533 = arith.addf %530, %532 : vector<16x128xf32>
    %534 = vector.broadcast %42 : f32 to vector<16x128xf32>
    %535 = arith.mulf %396, %534 : vector<16x128xf32>
    %536 = arith.addf %533, %535 : vector<16x128xf32>
    %537 = vector.broadcast %43 : f32 to vector<16x128xf32>
    %538 = arith.mulf %386, %537 : vector<16x128xf32>
    %539 = arith.addf %536, %538 : vector<16x128xf32>
    %540 = vector.broadcast %44 : f32 to vector<16x128xf32>
    %541 = arith.mulf %398, %540 : vector<16x128xf32>
    %542 = arith.addf %539, %541 : vector<16x128xf32>
    %543 = math.tanh %542 : vector<16x128xf32>
    %544 = vector.broadcast %45 : f32 to vector<16x128xf32>
    %545 = arith.mulf %388, %544 : vector<16x128xf32>
    %546 = vector.broadcast %77 : f32 to vector<16x128xf32>
    %547 = arith.addf %546, %545 : vector<16x128xf32>
    %548 = vector.broadcast %46 : f32 to vector<16x128xf32>
    %549 = arith.mulf %384, %548 : vector<16x128xf32>
    %550 = arith.addf %547, %549 : vector<16x128xf32>
    %551 = vector.broadcast %47 : f32 to vector<16x128xf32>
    %552 = arith.mulf %390, %551 : vector<16x128xf32>
    %553 = arith.addf %550, %552 : vector<16x128xf32>
    %554 = vector.broadcast %48 : f32 to vector<16x128xf32>
    %555 = arith.mulf %392, %554 : vector<16x128xf32>
    %556 = arith.addf %553, %555 : vector<16x128xf32>
    %557 = vector.broadcast %49 : f32 to vector<16x128xf32>
    %558 = arith.mulf %382, %557 : vector<16x128xf32>
    %559 = arith.addf %556, %558 : vector<16x128xf32>
    %560 = vector.broadcast %50 : f32 to vector<16x128xf32>
    %561 = arith.mulf %394, %560 : vector<16x128xf32>
    %562 = arith.addf %559, %561 : vector<16x128xf32>
    %563 = vector.broadcast %51 : f32 to vector<16x128xf32>
    %564 = arith.mulf %396, %563 : vector<16x128xf32>
    %565 = arith.addf %562, %564 : vector<16x128xf32>
    %566 = vector.broadcast %52 : f32 to vector<16x128xf32>
    %567 = arith.mulf %386, %566 : vector<16x128xf32>
    %568 = arith.addf %565, %567 : vector<16x128xf32>
    %569 = vector.broadcast %53 : f32 to vector<16x128xf32>
    %570 = arith.mulf %398, %569 : vector<16x128xf32>
    %571 = arith.addf %568, %570 : vector<16x128xf32>
    %572 = math.tanh %571 : vector<16x128xf32>
    %573 = vector.broadcast %54 : f32 to vector<16x128xf32>
    %574 = arith.mulf %388, %573 : vector<16x128xf32>
    %575 = vector.broadcast %78 : f32 to vector<16x128xf32>
    %576 = arith.addf %575, %574 : vector<16x128xf32>
    %577 = vector.broadcast %55 : f32 to vector<16x128xf32>
    %578 = arith.mulf %384, %577 : vector<16x128xf32>
    %579 = arith.addf %576, %578 : vector<16x128xf32>
    %580 = vector.broadcast %56 : f32 to vector<16x128xf32>
    %581 = arith.mulf %390, %580 : vector<16x128xf32>
    %582 = arith.addf %579, %581 : vector<16x128xf32>
    %583 = vector.broadcast %57 : f32 to vector<16x128xf32>
    %584 = arith.mulf %392, %583 : vector<16x128xf32>
    %585 = arith.addf %582, %584 : vector<16x128xf32>
    %586 = vector.broadcast %58 : f32 to vector<16x128xf32>
    %587 = arith.mulf %382, %586 : vector<16x128xf32>
    %588 = arith.addf %585, %587 : vector<16x128xf32>
    %589 = vector.broadcast %59 : f32 to vector<16x128xf32>
    %590 = arith.mulf %394, %589 : vector<16x128xf32>
    %591 = arith.addf %588, %590 : vector<16x128xf32>
    %592 = vector.broadcast %60 : f32 to vector<16x128xf32>
    %593 = arith.mulf %396, %592 : vector<16x128xf32>
    %594 = arith.addf %591, %593 : vector<16x128xf32>
    %595 = vector.broadcast %61 : f32 to vector<16x128xf32>
    %596 = arith.mulf %386, %595 : vector<16x128xf32>
    %597 = arith.addf %594, %596 : vector<16x128xf32>
    %598 = vector.broadcast %62 : f32 to vector<16x128xf32>
    %599 = arith.mulf %398, %598 : vector<16x128xf32>
    %600 = arith.addf %597, %599 : vector<16x128xf32>
    %601 = math.tanh %600 : vector<16x128xf32>
    %602 = vector.broadcast %63 : f32 to vector<16x128xf32>
    %603 = arith.mulf %388, %602 : vector<16x128xf32>
    %604 = vector.broadcast %79 : f32 to vector<16x128xf32>
    %605 = arith.addf %604, %603 : vector<16x128xf32>
    %606 = vector.broadcast %64 : f32 to vector<16x128xf32>
    %607 = arith.mulf %384, %606 : vector<16x128xf32>
    %608 = arith.addf %605, %607 : vector<16x128xf32>
    %609 = vector.broadcast %65 : f32 to vector<16x128xf32>
    %610 = arith.mulf %390, %609 : vector<16x128xf32>
    %611 = arith.addf %608, %610 : vector<16x128xf32>
    %612 = vector.broadcast %66 : f32 to vector<16x128xf32>
    %613 = arith.mulf %392, %612 : vector<16x128xf32>
    %614 = arith.addf %611, %613 : vector<16x128xf32>
    %615 = vector.broadcast %67 : f32 to vector<16x128xf32>
    %616 = arith.mulf %382, %615 : vector<16x128xf32>
    %617 = arith.addf %614, %616 : vector<16x128xf32>
    %618 = vector.broadcast %68 : f32 to vector<16x128xf32>
    %619 = arith.mulf %394, %618 : vector<16x128xf32>
    %620 = arith.addf %617, %619 : vector<16x128xf32>
    %621 = vector.broadcast %69 : f32 to vector<16x128xf32>
    %622 = arith.mulf %396, %621 : vector<16x128xf32>
    %623 = arith.addf %620, %622 : vector<16x128xf32>
    %624 = vector.broadcast %70 : f32 to vector<16x128xf32>
    %625 = arith.mulf %386, %624 : vector<16x128xf32>
    %626 = arith.addf %623, %625 : vector<16x128xf32>
    %627 = vector.broadcast %71 : f32 to vector<16x128xf32>
    %628 = arith.mulf %398, %627 : vector<16x128xf32>
    %629 = arith.addf %626, %628 : vector<16x128xf32>
    %630 = math.tanh %629 : vector<16x128xf32>
    %c1_41 = arith.constant 1 : index
    %c0_42 = arith.constant 0 : index
    %c0_43 = arith.constant 0 : index
    %c0_44 = arith.constant 0 : index
    %631 = vector.load %arg2[%c1_41, %c0_42, %c0_43, %c0_44] : memref<2x1x16x128xf32, #tpu.memory_space<vmem>>, vector<1x1x16x128xf32>
    %632 = vector.shape_cast %631 : vector<1x1x16x128xf32> to vector<16x128xf32>
    %633 = arith.mulf %632, %632 : vector<16x128xf32>
    %634 = arith.subf %633, %632 : vector<16x128xf32>
    %635 = arith.mulf %427, %634 : vector<16x128xf32>
    %636 = arith.subf %632, %635 : vector<16x128xf32>
    %637 = arith.mulf %636, %636 : vector<16x128xf32>
    %638 = arith.subf %637, %636 : vector<16x128xf32>
    %639 = arith.mulf %456, %638 : vector<16x128xf32>
    %640 = arith.subf %636, %639 : vector<16x128xf32>
    %641 = arith.mulf %640, %640 : vector<16x128xf32>
    %642 = arith.subf %641, %640 : vector<16x128xf32>
    %643 = arith.mulf %485, %642 : vector<16x128xf32>
    %644 = arith.subf %640, %643 : vector<16x128xf32>
    %645 = arith.mulf %644, %644 : vector<16x128xf32>
    %646 = arith.subf %645, %644 : vector<16x128xf32>
    %647 = arith.mulf %514, %646 : vector<16x128xf32>
    %648 = arith.subf %644, %647 : vector<16x128xf32>
    %649 = arith.mulf %648, %648 : vector<16x128xf32>
    %650 = arith.subf %649, %648 : vector<16x128xf32>
    %651 = arith.mulf %543, %650 : vector<16x128xf32>
    %652 = arith.subf %648, %651 : vector<16x128xf32>
    %653 = arith.mulf %652, %652 : vector<16x128xf32>
    %654 = arith.subf %653, %652 : vector<16x128xf32>
    %655 = arith.mulf %572, %654 : vector<16x128xf32>
    %656 = arith.subf %652, %655 : vector<16x128xf32>
    %657 = arith.mulf %656, %656 : vector<16x128xf32>
    %658 = arith.subf %657, %656 : vector<16x128xf32>
    %659 = arith.mulf %601, %658 : vector<16x128xf32>
    %660 = arith.subf %656, %659 : vector<16x128xf32>
    %661 = arith.mulf %660, %660 : vector<16x128xf32>
    %662 = arith.subf %661, %660 : vector<16x128xf32>
    %663 = arith.mulf %630, %662 : vector<16x128xf32>
    %664 = arith.subf %660, %663 : vector<16x128xf32>
    %cst_45 = arith.constant 0.000000e+00 : f32
    %cst_46 = arith.constant 1.000000e+00 : f32
    %665 = vector.broadcast %cst_45 : f32 to vector<16x128xf32>
    %666 = arith.maximumf %665, %664 : vector<16x128xf32>
    %667 = vector.broadcast %cst_46 : f32 to vector<16x128xf32>
    %668 = arith.minimumf %667, %666 : vector<16x128xf32>
    %c1_47 = arith.constant 1 : index
    %c0_48 = arith.constant 0 : index
    %c0_49 = arith.constant 0 : index
    %c0_50 = arith.constant 0 : index
    %669 = vector.load %arg4[%c1_47, %c0_48, %c0_49, %c0_50] : memref<2x1x16x128xf32, #tpu.memory_space<vmem>>, vector<1x1x16x128xf32>
    %670 = vector.shape_cast %669 : vector<1x1x16x128xf32> to vector<16x128xf32>
    %671 = vector.shape_cast %668 : vector<16x128xf32> to vector<1x1x16x128xf32>
    tpu.vector_store %arg4[%c1_47, %c0_48, %c0_49, %c0_50], %671 {strides = array<i32>} : memref<2x1x16x128xf32, #tpu.memory_space<vmem>>, vector<1x1x16x128xf32>,
    return
  }
}

</mosaic_0001>

<llo_original>
// kernel: iterable_refine.1
$region0: #{iterable_refine.1}
  #allocation0 [shape = 'u32[]', space=smem, size = 0x4, offset = 0x4, fixed_abs, tag = 'smem constant byte address 0x4 - core index']
  #allocation1 [shape = 'u32[144,128]{1,0:T(1,128)}', space=vmem, size = 0x12000, scoped, tag = 'internal scratch']
  %s0 = inlined_call_operand.vmem [shape: f32[72], index: 0, kind: input, shape index: {}]
  %s1 = inlined_call_operand.vmem [shape: f32[8], index: 1, kind: input, shape index: {}]
  %s2 = inlined_call_operand.hbm [shape: f32[2,1,16,128], index: 2, kind: input, shape index: {}, may-alias: {2,4}]
  %s3 = inlined_call_operand.vmem [shape: f32[2,1,16,128], index: 3, kind: input, shape index: {}]
  %s4 = inlined_call_operand.hbm [shape: f32[2,1,16,128], index: 4, kind: output, shape index: {}, may-alias: {2,4}]
  %s5 = sld [smem:[#allocation0]]
  $region38: #{iterable_refine.1} parent=0
    _
  %s7 = ssub.s32 1, %s5
  %s8 = scalar_select 0, %s7, %s5
  $region1: #{iterable_refine.1} parent=0
    #allocation2 [shape = 'u8[512]{0}', space=smem, size = 0x200, scoped, tag = 'input window, operand 0, single buffered']
    #allocation3 [shape = 's32[1]{0}', space=sflag, size = 0x4, scoped, tag = 'scoped memory for iterable_refine.1']
    #allocation4 [shape = 's32[1]{0}', space=sflag, size = 0x4, scoped, tag = 'scoped memory for iterable_refine.1']
    #allocation5 [shape = 's32[1]{0}', space=sflag, size = 0x4, scoped, tag = 'scoped memory for iterable_refine.1']
    #allocation6 [shape = 'u8[512]{0}', space=smem, size = 0x200, scoped, tag = 'input window, operand 1, single buffered']
    #allocation7 [shape = 's32[1]{0}', space=sflag, size = 0x4, scoped, tag = 'scoped memory for iterable_refine.1']
    #allocation8 [shape = 'u8[16384]{0}', space=vmem, size = 0x4000, scoped, tag = 'input window, operand 2, single buffered']
    #allocation9 [shape = 'u8[16384]{0}', space=vmem, size = 0x4000, scoped, tag = 'output window, operand 0, single buffered']
    %9 = vsyncpa [#allocation5], 0
    %10 = vsyncpa [#allocation7], 0
    %11 = vsyncpa [#allocation3], 0
    %12 = vsyncpa [#allocation4], 0
    // Predicated region
    $region2: #{iterable_refine.1} parent=1 // pred_check
      _
    $region3: #{iterable_refine.1} parent=1 // pred_check_branch
      %14 = sbr.rel (0) target = $region5
    $region4: #{iterable_refine.1} parent=1 // pred_region
      %s16 = ssub.s32 16, 16
      %17 = vsyncadd [#allocation5], %s16
      %s19 = sshll.u32 %s0, 4
      %s20 = int_to_ptr.vmem [resolvable:$true] %s19
      %22 = dma.vmem_to_smem %s20, 16, [#allocation2], [#allocation5]
    $region5: #{iterable_refine.1} parent=1 // pred_fallthru
      _
    // Predicated region
    $region6: #{iterable_refine.1} parent=1 // pred_check
      _
    $region7: #{iterable_refine.1} parent=1 // pred_check_branch
      %24 = sbr.rel (0) target = $region9
    $region8: #{iterable_refine.1} parent=1 // pred_region
      %s26 = ssub.s32 16, 16
      %27 = vsyncadd [#allocation7], %s26
      %s29 = sshll.u32 %s1, 4
      %s30 = int_to_ptr.vmem [resolvable:$true] %s29
      %32 = dma.vmem_to_smem %s30, 16, [#allocation6], [#allocation7]
    $region9: #{iterable_refine.1} parent=1 // pred_fallthru
      _
    // Predicated region
    $region10: #{iterable_refine.1} parent=1 // pred_check
      _
    $region11: #{iterable_refine.1} parent=1 // pred_check_branch
      %34 = sbr.rel (0) target = $region13
    $region12: #{iterable_refine.1} parent=1 // pred_region
      %s36 = ssub.s32 512, 512
      %37 = vsyncadd [#allocation3], %s36
      %s38 = sshll.u32 [#allocation8], 4
      %s39 = int_to_ptr.vmem [resolvable:$true] %s38
      %44 = dma.hbm_to_vmem [thread:$0]  %s2, 512, %s39, [#allocation3], 128, 128, 8
    $region13: #{iterable_refine.1} parent=1 // pred_fallthru
      _
    // Predicated region
    $region14: #{iterable_refine.1} parent=1 // pred_check
      _
    $region15: #{iterable_refine.1} parent=1 // pred_check_branch
      %46 = sbr.rel (0) target = $region17
    $region16: #{iterable_refine.1} parent=1 // pred_region
      _
    $region17: #{iterable_refine.1} parent=1 // pred_fallthru
      _
    // Predicated region
    $region18: #{iterable_refine.1} parent=1 // pred_check
      _
    $region19: #{iterable_refine.1} parent=1 // pred_check_branch
      %48 = sbr.rel (0) target = $region21
    $region20: #{iterable_refine.1} parent=1 // pred_region
      %49 = dma.done [#allocation5], 16
    $region21: #{iterable_refine.1} parent=1 // pred_fallthru
      _
    // Predicated region
    $region22: #{iterable_refine.1} parent=1 // pred_check
      _
    $region23: #{iterable_refine.1} parent=1 // pred_check_branch
      %51 = sbr.rel (0) target = $region25
    $region24: #{iterable_refine.1} parent=1 // pred_region
      %52 = dma.done [#allocation7], 16
    $region25: #{iterable_refine.1} parent=1 // pred_fallthru
      _
    // Predicated region
    $region26: #{iterable_refine.1} parent=1 // pred_check
      _
    $region27: #{iterable_refine.1} parent=1 // pred_check_branch
      %54 = sbr.rel (0) target = $region29
    $region28: #{iterable_refine.1} parent=1 // pred_region
      %55 = dma.done [#allocation3], 512
    $region29: #{iterable_refine.1} parent=1 // pred_fallthru
      _
    %56 = sfence
    %s57 = sld [smem:[#allocation2]]
    %s58 = sld [smem:[#allocation2 + $0x1]]
    %s59 = sld [smem:[#allocation2 + $0x2]]
    %s60 = sld [smem:[#allocation2 + $0x3]]
    %s61 = sld [smem:[#allocation2 + $0x4]]
    %s62 = sld [smem:[#allocation2 + $0x5]]
    %s63 = sld [smem:[#allocation2 + $0x6]]
    %s64 = sld [smem:[#allocation2 + $0x7]]
    %s65 = sld [smem:[#allocation2 + $0x8]]
    %s66 = sld [smem:[#allocation2 + $0x9]]
    %s67 = sld [smem:[#allocation2 + $0xa]]
    %s68 = sld [smem:[#allocation2 + $0xb]]
    %s69 = sld [smem:[#allocation2 + $0xc]]
    %s70 = sld [smem:[#allocation2 + $0xd]]
    %s71 = sld [smem:[#allocation2 + $0xe]]
    %s72 = sld [smem:[#allocation2 + $0xf]]
    %s73 = sld [smem:[#allocation2 + $0x10]]
    %s74 = sld [smem:[#allocation2 + $0x11]]
    %s75 = sld [smem:[#allocation2 + $0x12]]
    %s76 = sld [smem:[#allocation2 + $0x13]]
    %s77 = sld [smem:[#allocation2 + $0x14]]
    %s78 = sld [smem:[#allocation2 + $0x15]]
    %s79 = sld [smem:[#allocation2 + $0x16]]
    %s80 = sld [smem:[#allocation2 + $0x17]]
    %s81 = sld [smem:[#allocation2 + $0x18]]
    %s82 = sld [smem:[#allocation2 + $0x19]]
    %s83 = sld [smem:[#allocation2 + $0x1a]]
    %s84 = sld [smem:[#allocation2 + $0x1b]]
    %s85 = sld [smem:[#allocation2 + $0x1c]]
    %s86 = sld [smem:[#allocation2 + $0x1d]]
    %s87 = sld [smem:[#allocation2 + $0x1e]]
    %s88 = sld [smem:[#allocation2 + $0x1f]]
    %s89 = sld [smem:[#allocation2 + $0x20]]
    %s90 = sld [smem:[#allocation2 + $0x21]]
    %s91 = sld [smem:[#allocation2 + $0x22]]
    %s92 = sld [smem:[#allocation2 + $0x23]]
    %s93 = sld [smem:[#allocation2 + $0x24]]
    %s94 = sld [smem:[#allocation2 + $0x25]]
    %s95 = sld [smem:[#allocation2 + $0x26]]
    %s96 = sld [smem:[#allocation2 + $0x27]]
    %s97 = sld [smem:[#allocation2 + $0x28]]
    %s98 = sld [smem:[#allocation2 + $0x29]]
    %s99 = sld [smem:[#allocation2 + $0x2a]]
    %s100 = sld [smem:[#allocation2 + $0x2b]]
    %s101 = sld [smem:[#allocation2 + $0x2c]]
    %s102 = sld [smem:[#allocation2 + $0x2d]]
    %s103 = sld [smem:[#allocation2 + $0x2e]]
    %s104 = sld [smem:[#allocation2 + $0x2f]]
    %s105 = sld [smem:[#allocation2 + $0x30]]
    %s106 = sld [smem:[#allocation2 + $0x31]]
    %s107 = sld [smem:[#allocation2 + $0x32]]
    %s108 = sld [smem:[#allocation2 + $0x33]]
    %s109 = sld [smem:[#allocation2 + $0x34]]
    %s110 = sld [smem:[#allocation2 + $0x35]]
    %s111 = sld [smem:[#allocation2 + $0x36]]
    %s112 = sld [smem:[#allocation2 + $0x37]]
    %s113 = sld [smem:[#allocation2 + $0x38]]
    %s114 = sld [smem:[#allocation2 + $0x39]]
    %s115 = sld [smem:[#allocation2 + $0x3a]]
    %s116 = sld [smem:[#allocation2 + $0x3b]]
    %s117 = sld [smem:[#allocation2 + $0x3c]]
    %s118 = sld [smem:[#allocation2 + $0x3d]]
    %s119 = sld [smem:[#allocation2 + $0x3e]]
    %s120 = sld [smem:[#allocation2 + $0x3f]]
    %s121 = sld [smem:[#allocation2 + $0x40]]
    %s122 = sld [smem:[#allocation2 + $0x41]]
    %s123 = sld [smem:[#allocation2 + $0x42]]
    %s124 = sld [smem:[#allocation2 + $0x43]]
    %s125 = sld [smem:[#allocation2 + $0x44]]
    %s126 = sld [smem:[#allocation2 + $0x45]]
    %s127 = sld [smem:[#allocation2 + $0x46]]
    %s128 = sld [smem:[#allocation2 + $0x47]]
    %s129 = sld [smem:[#allocation6]]
    %s130 = sld [smem:[#allocation6 + $0x1]]
    %s131 = sld [smem:[#allocation6 + $0x2]]
    %s132 = sld [smem:[#allocation6 + $0x3]]
    %s133 = sld [smem:[#allocation6 + $0x4]]
    %s134 = sld [smem:[#allocation6 + $0x5]]
    %s135 = sld [smem:[#allocation6 + $0x6]]
    %s136 = sld [smem:[#allocation6 + $0x7]]
    %v137 = vlaneseq
    %v138 = vshrl.u32 %v137, 7
    %v139 = vadd.s32 %v138, 8
    %v140 = vlaneseq
    %v141 = vand.u32 %v140, 127
    %vm142 = vcmp.eq.s32.totalorder %v138, 0
    %vm143 = vcmp.eq.s32.totalorder %v139, 0
    %vm144 = vcmp.eq.s32.totalorder %v138, 15
    %vm145 = vcmp.eq.s32.totalorder %v139, 15
    %vm146 = vcmp.eq.s32.totalorder %v141, 0
    %vm147 = vcmp.eq.s32.totalorder %v141, 127
    %v148 = vld [vmem:[%s3] sm:$0xff]
    %v149 = vld [vmem:[%s3 + $0x8] sm:$0xff]
    %v150 = vrot.slane %v148, 7
    %v151 = vrot.slane %v149, 7
    %vm152 = vcmp.lt.s32.totalorder %v138, 1
    %v153 = vsel %vm152, %v150, %v151
    %v154 = vsel %vm152, %v151, %v150
    %v155 = vsel %vm142, %v148, %v154
    %v156 = vsel %vm143, %v149, %v153
    %v157 = vrot.slane %v148, 1
    %v158 = vrot.slane %v149, 1
    %vm159 = vcmp.lt.s32.totalorder %v138, 7
    %v160 = vsel %vm159, %v157, %v158
    %v161 = vsel %vm159, %v158, %v157
    %v162 = vsel %vm144, %v148, %v160
    %v163 = vsel %vm145, %v149, %v161
    %164 = vrot.lane.b32.xlu0 %v155, 1
    %v165 = vpop.permute.xlu0 %164
    %166 = vrot.lane.b32.xlu0 %v156, 1
    %v167 = vpop.permute.xlu0 %166
    %v168 = vsel %vm146, %v155, %v165
    %v169 = vsel %vm146, %v156, %v167
    %170 = vrot.lane.b32.xlu0 %v155, 127
    %v171 = vpop.permute.xlu0 %170
    %172 = vrot.lane.b32.xlu0 %v156, 127
    %v173 = vpop.permute.xlu0 %172
    %v174 = vsel %vm147, %v155, %v171
    %v175 = vsel %vm147, %v156, %v173
    %176 = vrot.lane.b32.xlu0 %v148, 1
    %v177 = vpop.permute.xlu0 %176
    %178 = vrot.lane.b32.xlu0 %v149, 1
    %v179 = vpop.permute.xlu0 %178
    %v180 = vsel %vm146, %v148, %v177
    %v181 = vsel %vm146, %v149, %v179
    %182 = vrot.lane.b32.xlu0 %v148, 127
    %v183 = vpop.permute.xlu0 %182
    %184 = vrot.lane.b32.xlu0 %v149, 127
    %v185 = vpop.permute.xlu0 %184
    %v186 = vsel %vm147, %v148, %v183
    %v187 = vsel %vm147, %v149, %v185
    %188 = vrot.lane.b32.xlu0 %v162, 1
    %v189 = vpop.permute.xlu0 %188
    %190 = vrot.lane.b32.xlu0 %v163, 1
    %v191 = vpop.permute.xlu0 %190
    %v192 = vsel %vm146, %v162, %v189
    %v193 = vsel %vm146, %v163, %v191
    %194 = vrot.lane.b32.xlu0 %v162, 127
    %v195 = vpop.permute.xlu0 %194
    %196 = vrot.lane.b32.xlu0 %v163, 127
    %v197 = vpop.permute.xlu0 %196
    %v198 = vsel %vm147, %v162, %v195
    %v199 = vsel %vm147, %v163, %v197
    %v200 = vstv %s57
    %v201 = vmul.f32 %v168, %v200
    %v202 = vmul.f32 %v169, %v200
    %v203 = vstv %s129
    %v204 = vadd.f32 %v203, %v201
    %v205 = vadd.f32 %v203, %v202
    %v206 = vstv %s58
    %v207 = vmul.f32 %v155, %v206
    %v208 = vmul.f32 %v156, %v206
    %v209 = vadd.f32 %v204, %v207
    %v210 = vadd.f32 %v205, %v208
    %v211 = vstv %s59
    %v212 = vmul.f32 %v174, %v211
    %v213 = vmul.f32 %v175, %v211
    %v214 = vadd.f32 %v209, %v212
    %v215 = vadd.f32 %v210, %v213
    %v216 = vstv %s60
    %v217 = vmul.f32 %v180, %v216
    %v218 = vmul.f32 %v181, %v216
    %v219 = vadd.f32 %v214, %v217
    %v220 = vadd.f32 %v215, %v218
    %v221 = vstv %s61
    %v222 = vmul.f32 %v148, %v221
    %v223 = vmul.f32 %v149, %v221
    %v224 = vadd.f32 %v219, %v222
    %v225 = vadd.f32 %v220, %v223
    %v226 = vstv %s62
    %v227 = vmul.f32 %v186, %v226
    %v228 = vmul.f32 %v187, %v226
    %v229 = vadd.f32 %v224, %v227
    %v230 = vadd.f32 %v225, %v228
    %v231 = vstv %s63
    %v232 = vmul.f32 %v192, %v231
    %v233 = vmul.f32 %v193, %v231
    %v234 = vadd.f32 %v229, %v232
    %v235 = vadd.f32 %v230, %v233
    %v236 = vstv %s64
    %v237 = vmul.f32 %v162, %v236
    %v238 = vmul.f32 %v163, %v236
    %v239 = vadd.f32 %v234, %v237
    %v240 = vadd.f32 %v235, %v238
    %v241 = vstv %s65
    %v242 = vmul.f32 %v198, %v241
    %v243 = vmul.f32 %v199, %v241
    %v244 = vadd.f32 %v239, %v242
    %v245 = vadd.f32 %v240, %v243
    %v246 = vtanh.pop %v244
    %v247 = vtanh.pop %v245
    %v248 = vstv %s66
    %v249 = vmul.f32 %v168, %v248
    %v250 = vmul.f32 %v169, %v248
    %v251 = vstv %s130
    %v252 = vadd.f32 %v251, %v249
    %v253 = vadd.f32 %v251, %v250
    %v254 = vstv %s67
    %v255 = vmul.f32 %v155, %v254
    %v256 = vmul.f32 %v156, %v254
    %v257 = vadd.f32 %v252, %v255
    %v258 = vadd.f32 %v253, %v256
    %v259 = vstv %s68
    %v260 = vmul.f32 %v174, %v259
    %v261 = vmul.f32 %v175, %v259
    %v262 = vadd.f32 %v257, %v260
    %v263 = vadd.f32 %v258, %v261
    %v264 = vstv %s69
    %v265 = vmul.f32 %v180, %v264
    %v266 = vmul.f32 %v181, %v264
    %v267 = vadd.f32 %v262, %v265
    %v268 = vadd.f32 %v263, %v266
    %v269 = vstv %s70
    %v270 = vmul.f32 %v148, %v269
    %v271 = vmul.f32 %v149, %v269
    %v272 = vadd.f32 %v267, %v270
    %v273 = vadd.f32 %v268, %v271
    %v274 = vstv %s71
    %v275 = vmul.f32 %v186, %v274
    %v276 = vmul.f32 %v187, %v274
    %v277 = vadd.f32 %v272, %v275
    %v278 = vadd.f32 %v273, %v276
    %v279 = vstv %s72
    %v280 = vmul.f32 %v192, %v279
    %v281 = vmul.f32 %v193, %v279
    %v282 = vadd.f32 %v277, %v280
    %v283 = vadd.f32 %v278, %v281
    %v284 = vstv %s73
    %v285 = vmul.f32 %v162, %v284
    %v286 = vmul.f32 %v163, %v284
    %v287 = vadd.f32 %v282, %v285
    %v288 = vadd.f32 %v283, %v286
    %v289 = vstv %s74
    %v290 = vmul.f32 %v198, %v289
    %v291 = vmul.f32 %v199, %v289
    %v292 = vadd.f32 %v287, %v290
    %v293 = vadd.f32 %v288, %v291
    %v294 = vtanh.pop %v292
    %v295 = vtanh.pop %v293
    %v296 = vstv %s75
    %v297 = vmul.f32 %v168, %v296
    %v298 = vmul.f32 %v169, %v296
    %v299 = vstv %s131
    %v300 = vadd.f32 %v299, %v297
    %v301 = vadd.f32 %v299, %v298
    %v302 = vstv %s76
    %v303 = vmul.f32 %v155, %v302
    %v304 = vmul.f32 %v156, %v302
    %v305 = vadd.f32 %v300, %v303
    %v306 = vadd.f32 %v301, %v304
    %v307 = vstv %s77
    %v308 = vmul.f32 %v174, %v307
    %v309 = vmul.f32 %v175, %v307
    %v310 = vadd.f32 %v305, %v308
    %v311 = vadd.f32 %v306, %v309
    %v312 = vstv %s78
    %v313 = vmul.f32 %v180, %v312
    %v314 = vmul.f32 %v181, %v312
    %v315 = vadd.f32 %v310, %v313
    %v316 = vadd.f32 %v311, %v314
    %v317 = vstv %s79
    %v318 = vmul.f32 %v148, %v317
    %v319 = vmul.f32 %v149, %v317
    %v320 = vadd.f32 %v315, %v318
    %v321 = vadd.f32 %v316, %v319
    %v322 = vstv %s80
    %v323 = vmul.f32 %v186, %v322
    %v324 = vmul.f32 %v187, %v322
    %v325 = vadd.f32 %v320, %v323
    %v326 = vadd.f32 %v321, %v324
    %v327 = vstv %s81
    %v328 = vmul.f32 %v192, %v327
    %v329 = vmul.f32 %v193, %v327
    %v330 = vadd.f32 %v325, %v328
    %v331 = vadd.f32 %v326, %v329
    %v332 = vstv %s82
    %v333 = vmul.f32 %v162, %v332
    %v334 = vmul.f32 %v163, %v332
    %v335 = vadd.f32 %v330, %v333
    %v336 = vadd.f32 %v331, %v334
    %v337 = vstv %s83
    %v338 = vmul.f32 %v198, %v337
    %v339 = vmul.f32 %v199, %v337
    %v340 = vadd.f32 %v335, %v338
    %v341 = vadd.f32 %v336, %v339
    %v342 = vtanh.pop %v340
    %v343 = vtanh.pop %v341
    %v344 = vstv %s84
    %v345 = vmul.f32 %v168, %v344
    %v346 = vmul.f32 %v169, %v344
    %v347 = vstv %s132
    %v348 = vadd.f32 %v347, %v345
    %v349 = vadd.f32 %v347, %v346
    %v350 = vstv %s85
    %v351 = vmul.f32 %v155, %v350
    %v352 = vmul.f32 %v156, %v350
    %v353 = vadd.f32 %v348, %v351
    %v354 = vadd.f32 %v349, %v352
    %v355 = vstv %s86
    %v356 = vmul.f32 %v174, %v355
    %v357 = vmul.f32 %v175, %v355
    %v358 = vadd.f32 %v353, %v356
    %v359 = vadd.f32 %v354, %v357
    %v360 = vstv %s87
    %v361 = vmul.f32 %v180, %v360
    %v362 = vmul.f32 %v181, %v360
    %v363 = vadd.f32 %v358, %v361
    %v364 = vadd.f32 %v359, %v362
    %v365 = vstv %s88
    %v366 = vmul.f32 %v148, %v365
    %v367 = vmul.f32 %v149, %v365
    %v368 = vadd.f32 %v363, %v366
    %v369 = vadd.f32 %v364, %v367
    %v370 = vstv %s89
    %v371 = vmul.f32 %v186, %v370
    %v372 = vmul.f32 %v187, %v370
    %v373 = vadd.f32 %v368, %v371
    %v374 = vadd.f32 %v369, %v372
    %v375 = vstv %s90
    %v376 = vmul.f32 %v192, %v375
    %v377 = vmul.f32 %v193, %v375
    %v378 = vadd.f32 %v373, %v376
    %v379 = vadd.f32 %v374, %v377
    %v380 = vstv %s91
    %v381 = vmul.f32 %v162, %v380
    %v382 = vmul.f32 %v163, %v380
    %v383 = vadd.f32 %v378, %v381
    %v384 = vadd.f32 %v379, %v382
    %v385 = vstv %s92
    %v386 = vmul.f32 %v198, %v385
    %v387 = vmul.f32 %v199, %v385
    %v388 = vadd.f32 %v383, %v386
    %v389 = vadd.f32 %v384, %v387
    %v390 = vtanh.pop %v388
    %v391 = vtanh.pop %v389
    %v392 = vstv %s93
    %v393 = vmul.f32 %v168, %v392
    %v394 = vmul.f32 %v169, %v392
    %v395 = vstv %s133
    %v396 = vadd.f32 %v395, %v393
    %v397 = vadd.f32 %v395, %v394
    %v398 = vstv %s94
    %v399 = vmul.f32 %v155, %v398
    %v400 = vmul.f32 %v156, %v398
    %v401 = vadd.f32 %v396, %v399
    %v402 = vadd.f32 %v397, %v400
    %v403 = vstv %s95
    %v404 = vmul.f32 %v174, %v403
    %v405 = vmul.f32 %v175, %v403
    %v406 = vadd.f32 %v401, %v404
    %v407 = vadd.f32 %v402, %v405
    %v408 = vstv %s96
    %v409 = vmul.f32 %v180, %v408
    %v410 = vmul.f32 %v181, %v408
    %v411 = vadd.f32 %v406, %v409
    %v412 = vadd.f32 %v407, %v410
    %v413 = vstv %s97
    %v414 = vmul.f32 %v148, %v413
    %v415 = vmul.f32 %v149, %v413
    %v416 = vadd.f32 %v411, %v414
    %v417 = vadd.f32 %v412, %v415
    %v418 = vstv %s98
    %v419 = vmul.f32 %v186, %v418
    %v420 = vmul.f32 %v187, %v418
    %v421 = vadd.f32 %v416, %v419
    %v422 = vadd.f32 %v417, %v420
    %v423 = vstv %s99
    %v424 = vmul.f32 %v192, %v423
    %v425 = vmul.f32 %v193, %v423
    %v426 = vadd.f32 %v421, %v424
    %v427 = vadd.f32 %v422, %v425
    %v428 = vstv %s100
    %v429 = vmul.f32 %v162, %v428
    %v430 = vmul.f32 %v163, %v428
    %v431 = vadd.f32 %v426, %v429
    %v432 = vadd.f32 %v427, %v430
    %v433 = vstv %s101
    %v434 = vmul.f32 %v198, %v433
    %v435 = vmul.f32 %v199, %v433
    %v436 = vadd.f32 %v431, %v434
    %v437 = vadd.f32 %v432, %v435
    %v438 = vtanh.pop %v436
    %v439 = vtanh.pop %v437
    %v440 = vstv %s102
    %v441 = vmul.f32 %v168, %v440
    %v442 = vmul.f32 %v169, %v440
    %v443 = vstv %s134
    %v444 = vadd.f32 %v443, %v441
    %v445 = vadd.f32 %v443, %v442
    %v446 = vstv %s103
    %v447 = vmul.f32 %v155, %v446
    %v448 = vmul.f32 %v156, %v446
    %v449 = vadd.f32 %v444, %v447
    %v450 = vadd.f32 %v445, %v448
    %v451 = vstv %s104
    %v452 = vmul.f32 %v174, %v451
    %v453 = vmul.f32 %v175, %v451
    %v454 = vadd.f32 %v449, %v452
    %v455 = vadd.f32 %v450, %v453
    %v456 = vstv %s105
    %v457 = vmul.f32 %v180, %v456
    %v458 = vmul.f32 %v181, %v456
    %v459 = vadd.f32 %v454, %v457
    %v460 = vadd.f32 %v455, %v458
    %v461 = vstv %s106
    %v462 = vmul.f32 %v148, %v461
    %v463 = vmul.f32 %v149, %v461
    %v464 = vadd.f32 %v459, %v462
    %v465 = vadd.f32 %v460, %v463
    %v466 = vstv %s107
    %v467 = vmul.f32 %v186, %v466
    %v468 = vmul.f32 %v187, %v466
    %v469 = vadd.f32 %v464, %v467
    %v470 = vadd.f32 %v465, %v468
    %v471 = vstv %s108
    %v472 = vmul.f32 %v192, %v471
    %v473 = vmul.f32 %v193, %v471
    %v474 = vadd.f32 %v469, %v472
    %v475 = vadd.f32 %v470, %v473
    %v476 = vstv %s109
    %v477 = vmul.f32 %v162, %v476
    %v478 = vmul.f32 %v163, %v476
    %v479 = vadd.f32 %v474, %v477
    %v480 = vadd.f32 %v475, %v478
    %v481 = vstv %s110
    %v482 = vmul.f32 %v198, %v481
    %v483 = vmul.f32 %v199, %v481
    %v484 = vadd.f32 %v479, %v482
    %v485 = vadd.f32 %v480, %v483
    %v486 = vtanh.pop %v484
    %v487 = vtanh.pop %v485
    %v488 = vstv %s111
    %v489 = vmul.f32 %v168, %v488
    %v490 = vmul.f32 %v169, %v488
    %v491 = vstv %s135
    %v492 = vadd.f32 %v491, %v489
    %v493 = vadd.f32 %v491, %v490
    %v494 = vstv %s112
    %v495 = vmul.f32 %v155, %v494
    %v496 = vmul.f32 %v156, %v494
    %v497 = vadd.f32 %v492, %v495
    %v498 = vadd.f32 %v493, %v496
    %v499 = vstv %s113
    %v500 = vmul.f32 %v174, %v499
    %v501 = vmul.f32 %v175, %v499
    %v502 = vadd.f32 %v497, %v500
    %v503 = vadd.f32 %v498, %v501
    %v504 = vstv %s114
    %v505 = vmul.f32 %v180, %v504
    %v506 = vmul.f32 %v181, %v504
    %v507 = vadd.f32 %v502, %v505
    %v508 = vadd.f32 %v503, %v506
    %v509 = vstv %s115
    %v510 = vmul.f32 %v148, %v509
    %v511 = vmul.f32 %v149, %v509
    %v512 = vadd.f32 %v507, %v510
    %v513 = vadd.f32 %v508, %v511
    %v514 = vstv %s116
    %v515 = vmul.f32 %v186, %v514
    %v516 = vmul.f32 %v187, %v514
    %v517 = vadd.f32 %v512, %v515
    %v518 = vadd.f32 %v513, %v516
    %v519 = vstv %s117
    %v520 = vmul.f32 %v192, %v519
    %v521 = vmul.f32 %v193, %v519
    %v522 = vadd.f32 %v517, %v520
    %v523 = vadd.f32 %v518, %v521
    %v524 = vstv %s118
    %v525 = vmul.f32 %v162, %v524
    %v526 = vmul.f32 %v163, %v524
    %v527 = vadd.f32 %v522, %v525
    %v528 = vadd.f32 %v523, %v526
    %v529 = vstv %s119
    %v530 = vmul.f32 %v198, %v529
    %v531 = vmul.f32 %v199, %v529
    %v532 = vadd.f32 %v527, %v530
    %v533 = vadd.f32 %v528, %v531
    %v534 = vtanh.pop %v532
    %v535 = vtanh.pop %v533
    %v536 = vstv %s120
    %v537 = vmul.f32 %v168, %v536
    %v538 = vmul.f32 %v169, %v536
    %v539 = vstv %s136
    %v540 = vadd.f32 %v539, %v537
    %v541 = vadd.f32 %v539, %v538
    %v542 = vstv %s121
    %v543 = vmul.f32 %v155, %v542
    %v544 = vmul.f32 %v156, %v542
    %v545 = vadd.f32 %v540, %v543
    %v546 = vadd.f32 %v541, %v544
    %v547 = vstv %s122
    %v548 = vmul.f32 %v174, %v547
    %v549 = vmul.f32 %v175, %v547
    %v550 = vadd.f32 %v545, %v548
    %v551 = vadd.f32 %v546, %v549
    %v552 = vstv %s123
    %v553 = vmul.f32 %v180, %v552
    %v554 = vmul.f32 %v181, %v552
    %v555 = vadd.f32 %v550, %v553
    %v556 = vadd.f32 %v551, %v554
    %v557 = vstv %s124
    %v558 = vmul.f32 %v148, %v557
    %v559 = vmul.f32 %v149, %v557
    %v560 = vadd.f32 %v555, %v558
    %v561 = vadd.f32 %v556, %v559
    %v562 = vstv %s125
    %v563 = vmul.f32 %v186, %v562
    %v564 = vmul.f32 %v187, %v562
    %v565 = vadd.f32 %v560, %v563
    %v566 = vadd.f32 %v561, %v564
    %v567 = vstv %s126
    %v568 = vmul.f32 %v192, %v567
    %v569 = vmul.f32 %v193, %v567
    %v570 = vadd.f32 %v565, %v568
    %v571 = vadd.f32 %v566, %v569
    %v572 = vstv %s127
    %v573 = vmul.f32 %v162, %v572
    %v574 = vmul.f32 %v163, %v572
    %v575 = vadd.f32 %v570, %v573
    %v576 = vadd.f32 %v571, %v574
    %v577 = vstv %s128
    %v578 = vmul.f32 %v198, %v577
    %v579 = vmul.f32 %v199, %v577
    %v580 = vadd.f32 %v575, %v578
    %v581 = vadd.f32 %v576, %v579
    %v582 = vtanh.pop %v580
    %v583 = vtanh.pop %v581
    %v584 = vld [vmem:[#allocation8] sm:$0xff]
    %v585 = vld [vmem:[#allocation8 + $0x8] sm:$0xff]
    %v586 = vmul.f32 %v584, %v584
    %v587 = vmul.f32 %v585, %v585
    %v588 = vsub.f32 %v586, %v584
    %v589 = vsub.f32 %v587, %v585
    %v590 = vmul.f32 %v246, %v588
    %v591 = vmul.f32 %v247, %v589
    %v592 = vsub.f32 %v584, %v590
    %v593 = vsub.f32 %v585, %v591
    %v594 = vmul.f32 %v592, %v592
    %v595 = vmul.f32 %v593, %v593
    %v596 = vsub.f32 %v594, %v592
    %v597 = vsub.f32 %v595, %v593
    %v598 = vmul.f32 %v294, %v596
    %v599 = vmul.f32 %v295, %v597
    %v600 = vsub.f32 %v592, %v598
    %v601 = vsub.f32 %v593, %v599
    %v602 = vmul.f32 %v600, %v600
    %v603 = vmul.f32 %v601, %v601
    %v604 = vsub.f32 %v602, %v600
    %v605 = vsub.f32 %v603, %v601
    %v606 = vmul.f32 %v342, %v604
    %v607 = vmul.f32 %v343, %v605
    %v608 = vsub.f32 %v600, %v606
    %v609 = vsub.f32 %v601, %v607
    %v610 = vmul.f32 %v608, %v608
    %v611 = vmul.f32 %v609, %v609
    %v612 = vsub.f32 %v610, %v608
    %v613 = vsub.f32 %v611, %v609
    %v614 = vmul.f32 %v390, %v612
    %v615 = vmul.f32 %v391, %v613
    %v616 = vsub.f32 %v608, %v614
    %v617 = vsub.f32 %v609, %v615
    %v618 = vmul.f32 %v616, %v616
    %v619 = vmul.f32 %v617, %v617
    %v620 = vsub.f32 %v618, %v616
    %v621 = vsub.f32 %v619, %v617
    %v622 = vmul.f32 %v438, %v620
    %v623 = vmul.f32 %v439, %v621
    %v624 = vsub.f32 %v616, %v622
    %v625 = vsub.f32 %v617, %v623
    %v626 = vmul.f32 %v624, %v624
    %v627 = vmul.f32 %v625, %v625
    %v628 = vsub.f32 %v626, %v624
    %v629 = vsub.f32 %v627, %v625
    %v630 = vmul.f32 %v486, %v628
    %v631 = vmul.f32 %v487, %v629
    %v632 = vsub.f32 %v624, %v630
    %v633 = vsub.f32 %v625, %v631
    %v634 = vmul.f32 %v632, %v632
    %v635 = vmul.f32 %v633, %v633
    %v636 = vsub.f32 %v634, %v632
    %v637 = vsub.f32 %v635, %v633
    %v638 = vmul.f32 %v534, %v636
    %v639 = vmul.f32 %v535, %v637
    %v640 = vsub.f32 %v632, %v638
    %v641 = vsub.f32 %v633, %v639
    %v642 = vmul.f32 %v640, %v640
    %v643 = vmul.f32 %v641, %v641
    %v644 = vsub.f32 %v642, %v640
    %v645 = vsub.f32 %v643, %v641
    %v646 = vmul.f32 %v582, %v644
    %v647 = vmul.f32 %v583, %v645
    %v648 = vsub.f32 %v640, %v646
    %v649 = vsub.f32 %v641, %v647
    %v650 = vmax.f32 %v648, 0.0
    %v651 = vmax.f32 %v649, 0.0
    %v652 = vmin.f32 %v650, 1.0
    %v653 = vmin.f32 %v651, 1.0
    %654 = vst [vmem:[#allocation9] sm:$0xff] %v652
    %655 = vst [vmem:[#allocation9 + $0x8] sm:$0xff] %v653
    %s656 = scalar_lea.vmem %s3, 16
    %v657 = vld [vmem:[%s656] sm:$0xff]
    %v658 = vld [vmem:[%s656 + $0x8] sm:$0xff]
    %v659 = vrot.slane %v657, 7
    %v660 = vrot.slane %v658, 7
    %v661 = vsel %vm152, %v659, %v660
    %v662 = vsel %vm152, %v660, %v659
    %v663 = vsel %vm142, %v657, %v662
    %v664 = vsel %vm143, %v658, %v661
    %v665 = vrot.slane %v657, 1
    %v666 = vrot.slane %v658, 1
    %v667 = vsel %vm159, %v665, %v666
    %v668 = vsel %vm159, %v666, %v665
    %v669 = vsel %vm144, %v657, %v667
    %v670 = vsel %vm145, %v658, %v668
    %671 = vrot.lane.b32.xlu0 %v663, 1
    %v672 = vpop.permute.xlu0 %671
    %673 = vrot.lane.b32.xlu0 %v664, 1
    %v674 = vpop.permute.xlu0 %673
    %v675 = vsel %vm146, %v663, %v672
    %v676 = vsel %vm146, %v664, %v674
    %677 = vrot.lane.b32.xlu0 %v663, 127
    %v678 = vpop.permute.xlu0 %677
    %679 = vrot.lane.b32.xlu0 %v664, 127
    %v680 = vpop.permute.xlu0 %679
    %v681 = vsel %vm147, %v663, %v678
    %v682 = vsel %vm147, %v664, %v680
    %683 = vrot.lane.b32.xlu0 %v657, 1
    %v684 = vpop.permute.xlu0 %683
    %685 = vrot.lane.b32.xlu0 %v658, 1
    %v686 = vpop.permute.xlu0 %685
    %v687 = vsel %vm146, %v657, %v684
    %v688 = vsel %vm146, %v658, %v686
    %689 = vrot.lane.b32.xlu0 %v657, 127
    %v690 = vpop.permute.xlu0 %689
    %691 = vrot.lane.b32.xlu0 %v658, 127
    %v692 = vpop.permute.xlu0 %691
    %v693 = vsel %vm147, %v657, %v690
    %v694 = vsel %vm147, %v658, %v692
    %695 = vrot.lane.b32.xlu0 %v669, 1
    %v696 = vpop.permute.xlu0 %695
    %697 = vrot.lane.b32.xlu0 %v670, 1
    %v698 = vpop.permute.xlu0 %697
    %v699 = vsel %vm146, %v669, %v696
    %v700 = vsel %vm146, %v670, %v698
    %701 = vrot.lane.b32.xlu0 %v669, 127
    %v702 = vpop.permute.xlu0 %701
    %703 = vrot.lane.b32.xlu0 %v670, 127
    %v704 = vpop.permute.xlu0 %703
    %v705 = vsel %vm147, %v669, %v702
    %v706 = vsel %vm147, %v670, %v704
    %v707 = vmul.f32 %v675, %v200
    %v708 = vmul.f32 %v676, %v200
    %v709 = vadd.f32 %v203, %v707
    %v710 = vadd.f32 %v203, %v708
    %v711 = vmul.f32 %v663, %v206
    %v712 = vmul.f32 %v664, %v206
    %v713 = vadd.f32 %v709, %v711
    %v714 = vadd.f32 %v710, %v712
    %v715 = vmul.f32 %v681, %v211
    %v716 = vmul.f32 %v682, %v211
    %v717 = vadd.f32 %v713, %v715
    %v718 = vadd.f32 %v714, %v716
    %v719 = vmul.f32 %v687, %v216
    %v720 = vmul.f32 %v688, %v216
    %v721 = vadd.f32 %v717, %v719
    %v722 = vadd.f32 %v718, %v720
    %v723 = vmul.f32 %v657, %v221
    %v724 = vmul.f32 %v658, %v221
    %v725 = vadd.f32 %v721, %v723
    %v726 = vadd.f32 %v722, %v724
    %v727 = vmul.f32 %v693, %v226
    %v728 = vmul.f32 %v694, %v226
    %v729 = vadd.f32 %v725, %v727
    %v730 = vadd.f32 %v726, %v728
    %v731 = vmul.f32 %v699, %v231
    %v732 = vmul.f32 %v700, %v231
    %v733 = vadd.f32 %v729, %v731
    %v734 = vadd.f32 %v730, %v732
    %v735 = vmul.f32 %v669, %v236
    %v736 = vmul.f32 %v670, %v236
    %v737 = vadd.f32 %v733, %v735
    %v738 = vadd.f32 %v734, %v736
    %v739 = vmul.f32 %v705, %v241
    %v740 = vmul.f32 %v706, %v241
    %v741 = vadd.f32 %v737, %v739
    %v742 = vadd.f32 %v738, %v740
    %v743 = vtanh.pop %v741
    %v744 = vtanh.pop %v742
    %v745 = vmul.f32 %v675, %v248
    %v746 = vmul.f32 %v676, %v248
    %v747 = vadd.f32 %v251, %v745
    %v748 = vadd.f32 %v251, %v746
    %v749 = vmul.f32 %v663, %v254
    %v750 = vmul.f32 %v664, %v254
    %v751 = vadd.f32 %v747, %v749
    %v752 = vadd.f32 %v748, %v750
    %v753 = vmul.f32 %v681, %v259
    %v754 = vmul.f32 %v682, %v259
    %v755 = vadd.f32 %v751, %v753
    %v756 = vadd.f32 %v752, %v754
    %v757 = vmul.f32 %v687, %v264
    %v758 = vmul.f32 %v688, %v264
    %v759 = vadd.f32 %v755, %v757
    %v760 = vadd.f32 %v756, %v758
    %v761 = vmul.f32 %v657, %v269
    %v762 = vmul.f32 %v658, %v269
    %v763 = vadd.f32 %v759, %v761
    %v764 = vadd.f32 %v760, %v762
    %v765 = vmul.f32 %v693, %v274
    %v766 = vmul.f32 %v694, %v274
    %v767 = vadd.f32 %v763, %v765
    %v768 = vadd.f32 %v764, %v766
    %v769 = vmul.f32 %v699, %v279
    %v770 = vmul.f32 %v700, %v279
    %v771 = vadd.f32 %v767, %v769
    %v772 = vadd.f32 %v768, %v770
    %v773 = vmul.f32 %v669, %v284
    %v774 = vmul.f32 %v670, %v284
    %v775 = vadd.f32 %v771, %v773
    %v776 = vadd.f32 %v772, %v774
    %v777 = vmul.f32 %v705, %v289
    %v778 = vmul.f32 %v706, %v289
    %v779 = vadd.f32 %v775, %v777
    %v780 = vadd.f32 %v776, %v778
    %v781 = vtanh.pop %v779
    %v782 = vtanh.pop %v780
    %v783 = vmul.f32 %v675, %v296
    %v784 = vmul.f32 %v676, %v296
    %v785 = vadd.f32 %v299, %v783
    %v786 = vadd.f32 %v299, %v784
    %v787 = vmul.f32 %v663, %v302
    %v788 = vmul.f32 %v664, %v302
    %v789 = vadd.f32 %v785, %v787
    %v790 = vadd.f32 %v786, %v788
    %v791 = vmul.f32 %v681, %v307
    %v792 = vmul.f32 %v682, %v307
    %v793 = vadd.f32 %v789, %v791
    %v794 = vadd.f32 %v790, %v792
    %v795 = vmul.f32 %v687, %v312
    %v796 = vmul.f32 %v688, %v312
    %v797 = vadd.f32 %v793, %v795
    %v798 = vadd.f32 %v794, %v796
    %v799 = vmul.f32 %v657, %v317
    %v800 = vmul.f32 %v658, %v317
    %v801 = vadd.f32 %v797, %v799
    %v802 = vadd.f32 %v798, %v800
    %v803 = vmul.f32 %v693, %v322
    %v804 = vmul.f32 %v694, %v322
    %v805 = vadd.f32 %v801, %v803
    %v806 = vadd.f32 %v802, %v804
    %v807 = vmul.f32 %v699, %v327
    %v808 = vmul.f32 %v700, %v327
    %v809 = vadd.f32 %v805, %v807
    %v810 = vadd.f32 %v806, %v808
    %v811 = vmul.f32 %v669, %v332
    %v812 = vmul.f32 %v670, %v332
    %v813 = vadd.f32 %v809, %v811
    %v814 = vadd.f32 %v810, %v812
    %v815 = vmul.f32 %v705, %v337
    %v816 = vmul.f32 %v706, %v337
    %v817 = vadd.f32 %v813, %v815
    %v818 = vadd.f32 %v814, %v816
    %v819 = vtanh.pop %v817
    %v820 = vtanh.pop %v818
    %v821 = vmul.f32 %v675, %v344
    %v822 = vmul.f32 %v676, %v344
    %v823 = vadd.f32 %v347, %v821
    %v824 = vadd.f32 %v347, %v822
    %v825 = vmul.f32 %v663, %v350
    %v826 = vmul.f32 %v664, %v350
    %v827 = vadd.f32 %v823, %v825
    %v828 = vadd.f32 %v824, %v826
    %v829 = vmul.f32 %v681, %v355
    %v830 = vmul.f32 %v682, %v355
    %v831 = vadd.f32 %v827, %v829
    %v832 = vadd.f32 %v828, %v830
    %v833 = vmul.f32 %v687, %v360
    %v834 = vmul.f32 %v688, %v360
    %v835 = vadd.f32 %v831, %v833
    %v836 = vadd.f32 %v832, %v834
    %v837 = vmul.f32 %v657, %v365
    %v838 = vmul.f32 %v658, %v365
    %v839 = vadd.f32 %v835, %v837
    %v840 = vadd.f32 %v836, %v838
    %v841 = vmul.f32 %v693, %v370
    %v842 = vmul.f32 %v694, %v370
    %v843 = vadd.f32 %v839, %v841
    %v844 = vadd.f32 %v840, %v842
    %v845 = vmul.f32 %v699, %v375
    %v846 = vmul.f32 %v700, %v375
    %v847 = vadd.f32 %v843, %v845
    %v848 = vadd.f32 %v844, %v846
    %v849 = vmul.f32 %v669, %v380
    %v850 = vmul.f32 %v670, %v380
    %v851 = vadd.f32 %v847, %v849
    %v852 = vadd.f32 %v848, %v850
    %v853 = vmul.f32 %v705, %v385
    %v854 = vmul.f32 %v706, %v385
    %v855 = vadd.f32 %v851, %v853
    %v856 = vadd.f32 %v852, %v854
    %v857 = vtanh.pop %v855
    %v858 = vtanh.pop %v856
    %v859 = vmul.f32 %v675, %v392
    %v860 = vmul.f32 %v676, %v392
    %v861 = vadd.f32 %v395, %v859
    %v862 = vadd.f32 %v395, %v860
    %v863 = vmul.f32 %v663, %v398
    %v864 = vmul.f32 %v664, %v398
    %v865 = vadd.f32 %v861, %v863
    %v866 = vadd.f32 %v862, %v864
    %v867 = vmul.f32 %v681, %v403
    %v868 = vmul.f32 %v682, %v403
    %v869 = vadd.f32 %v865, %v867
    %v870 = vadd.f32 %v866, %v868
    %v871 = vmul.f32 %v687, %v408
    %v872 = vmul.f32 %v688, %v408
    %v873 = vadd.f32 %v869, %v871
    %v874 = vadd.f32 %v870, %v872
    %v875 = vmul.f32 %v657, %v413
    %v876 = vmul.f32 %v658, %v413
    %v877 = vadd.f32 %v873, %v875
    %v878 = vadd.f32 %v874, %v876
    %v879 = vmul.f32 %v693, %v418
    %v880 = vmul.f32 %v694, %v418
    %v881 = vadd.f32 %v877, %v879
    %v882 = vadd.f32 %v878, %v880
    %v883 = vmul.f32 %v699, %v423
    %v884 = vmul.f32 %v700, %v423
    %v885 = vadd.f32 %v881, %v883
    %v886 = vadd.f32 %v882, %v884
    %v887 = vmul.f32 %v669, %v428
    %v888 = vmul.f32 %v670, %v428
    %v889 = vadd.f32 %v885, %v887
    %v890 = vadd.f32 %v886, %v888
    %v891 = vmul.f32 %v705, %v433
    %v892 = vmul.f32 %v706, %v433
    %v893 = vadd.f32 %v889, %v891
    %v894 = vadd.f32 %v890, %v892
    %v895 = vtanh.pop %v893
    %v896 = vtanh.pop %v894
    %v897 = vmul.f32 %v675, %v440
    %v898 = vmul.f32 %v676, %v440
    %v899 = vadd.f32 %v443, %v897
    %v900 = vadd.f32 %v443, %v898
    %v901 = vmul.f32 %v663, %v446
    %v902 = vmul.f32 %v664, %v446
    %v903 = vadd.f32 %v899, %v901
    %v904 = vadd.f32 %v900, %v902
    %v905 = vmul.f32 %v681, %v451
    %v906 = vmul.f32 %v682, %v451
    %v907 = vadd.f32 %v903, %v905
    %v908 = vadd.f32 %v904, %v906
    %v909 = vmul.f32 %v687, %v456
    %v910 = vmul.f32 %v688, %v456
    %v911 = vadd.f32 %v907, %v909
    %v912 = vadd.f32 %v908, %v910
    %v913 = vmul.f32 %v657, %v461
    %v914 = vmul.f32 %v658, %v461
    %v915 = vadd.f32 %v911, %v913
    %v916 = vadd.f32 %v912, %v914
    %v917 = vmul.f32 %v693, %v466
    %v918 = vmul.f32 %v694, %v466
    %v919 = vadd.f32 %v915, %v917
    %v920 = vadd.f32 %v916, %v918
    %v921 = vmul.f32 %v699, %v471
    %v922 = vmul.f32 %v700, %v471
    %v923 = vadd.f32 %v919, %v921
    %v924 = vadd.f32 %v920, %v922
    %v925 = vmul.f32 %v669, %v476
    %v926 = vmul.f32 %v670, %v476
    %v927 = vadd.f32 %v923, %v925
    %v928 = vadd.f32 %v924, %v926
    %v929 = vmul.f32 %v705, %v481
    %v930 = vmul.f32 %v706, %v481
    %v931 = vadd.f32 %v927, %v929
    %v932 = vadd.f32 %v928, %v930
    %v933 = vtanh.pop %v931
    %v934 = vtanh.pop %v932
    %v935 = vmul.f32 %v675, %v488
    %v936 = vmul.f32 %v676, %v488
    %v937 = vadd.f32 %v491, %v935
    %v938 = vadd.f32 %v491, %v936
    %v939 = vmul.f32 %v663, %v494
    %v940 = vmul.f32 %v664, %v494
    %v941 = vadd.f32 %v937, %v939
    %v942 = vadd.f32 %v938, %v940
    %v943 = vmul.f32 %v681, %v499
    %v944 = vmul.f32 %v682, %v499
    %v945 = vadd.f32 %v941, %v943
    %v946 = vadd.f32 %v942, %v944
    %v947 = vmul.f32 %v687, %v504
    %v948 = vmul.f32 %v688, %v504
    %v949 = vadd.f32 %v945, %v947
    %v950 = vadd.f32 %v946, %v948
    %v951 = vmul.f32 %v657, %v509
    %v952 = vmul.f32 %v658, %v509
    %v953 = vadd.f32 %v949, %v951
    %v954 = vadd.f32 %v950, %v952
    %v955 = vmul.f32 %v693, %v514
    %v956 = vmul.f32 %v694, %v514
    %v957 = vadd.f32 %v953, %v955
    %v958 = vadd.f32 %v954, %v956
    %v959 = vmul.f32 %v699, %v519
    %v960 = vmul.f32 %v700, %v519
    %v961 = vadd.f32 %v957, %v959
    %v962 = vadd.f32 %v958, %v960
    %v963 = vmul.f32 %v669, %v524
    %v964 = vmul.f32 %v670, %v524
    %v965 = vadd.f32 %v961, %v963
    %v966 = vadd.f32 %v962, %v964
    %v967 = vmul.f32 %v705, %v529
    %v968 = vmul.f32 %v706, %v529
    %v969 = vadd.f32 %v965, %v967
    %v970 = vadd.f32 %v966, %v968
    %v971 = vtanh.pop %v969
    %v972 = vtanh.pop %v970
    %v973 = vmul.f32 %v675, %v536
    %v974 = vmul.f32 %v676, %v536
    %v975 = vadd.f32 %v539, %v973
    %v976 = vadd.f32 %v539, %v974
    %v977 = vmul.f32 %v663, %v542
    %v978 = vmul.f32 %v664, %v542
    %v979 = vadd.f32 %v975, %v977
    %v980 = vadd.f32 %v976, %v978
    %v981 = vmul.f32 %v681, %v547
    %v982 = vmul.f32 %v682, %v547
    %v983 = vadd.f32 %v979, %v981
    %v984 = vadd.f32 %v980, %v982
    %v985 = vmul.f32 %v687, %v552
    %v986 = vmul.f32 %v688, %v552
    %v987 = vadd.f32 %v983, %v985
    %v988 = vadd.f32 %v984, %v986
    %v989 = vmul.f32 %v657, %v557
    %v990 = vmul.f32 %v658, %v557
    %v991 = vadd.f32 %v987, %v989
    %v992 = vadd.f32 %v988, %v990
    %v993 = vmul.f32 %v693, %v562
    %v994 = vmul.f32 %v694, %v562
    %v995 = vadd.f32 %v991, %v993
    %v996 = vadd.f32 %v992, %v994
    %v997 = vmul.f32 %v699, %v567
    %v998 = vmul.f32 %v700, %v567
    %v999 = vadd.f32 %v995, %v997
    %v1000 = vadd.f32 %v996, %v998
    %v1001 = vmul.f32 %v669, %v572
    %v1002 = vmul.f32 %v670, %v572
    %v1003 = vadd.f32 %v999, %v1001
    %v1004 = vadd.f32 %v1000, %v1002
    %v1005 = vmul.f32 %v705, %v577
    %v1006 = vmul.f32 %v706, %v577
    %v1007 = vadd.f32 %v1003, %v1005
    %v1008 = vadd.f32 %v1004, %v1006
    %v1009 = vtanh.pop %v1007
    %v1010 = vtanh.pop %v1008
    %s1011 = scalar_lea.vmem [#allocation8], 16
    %v1012 = vld [vmem:[%s1011] sm:$0xff]
    %v1013 = vld [vmem:[%s1011 + $0x8] sm:$0xff]
    %v1014 = vmul.f32 %v1012, %v1012
    %v1015 = vmul.f32 %v1013, %v1013
    %v1016 = vsub.f32 %v1014, %v1012
    %v1017 = vsub.f32 %v1015, %v1013
    %v1018 = vmul.f32 %v743, %v1016
    %v1019 = vmul.f32 %v744, %v1017
    %v1020 = vsub.f32 %v1012, %v1018
    %v1021 = vsub.f32 %v1013, %v1019
    %v1022 = vmul.f32 %v1020, %v1020
    %v1023 = vmul.f32 %v1021, %v1021
    %v1024 = vsub.f32 %v1022, %v1020
    %v1025 = vsub.f32 %v1023, %v1021
    %v1026 = vmul.f32 %v781, %v1024
    %v1027 = vmul.f32 %v782, %v1025
    %v1028 = vsub.f32 %v1020, %v1026
    %v1029 = vsub.f32 %v1021, %v1027
    %v1030 = vmul.f32 %v1028, %v1028
    %v1031 = vmul.f32 %v1029, %v1029
    %v1032 = vsub.f32 %v1030, %v1028
    %v1033 = vsub.f32 %v1031, %v1029
    %v1034 = vmul.f32 %v819, %v1032
    %v1035 = vmul.f32 %v820, %v1033
    %v1036 = vsub.f32 %v1028, %v1034
    %v1037 = vsub.f32 %v1029, %v1035
    %v1038 = vmul.f32 %v1036, %v1036
    %v1039 = vmul.f32 %v1037, %v1037
    %v1040 = vsub.f32 %v1038, %v1036
    %v1041 = vsub.f32 %v1039, %v1037
    %v1042 = vmul.f32 %v857, %v1040
    %v1043 = vmul.f32 %v858, %v1041
    %v1044 = vsub.f32 %v1036, %v1042
    %v1045 = vsub.f32 %v1037, %v1043
    %v1046 = vmul.f32 %v1044, %v1044
    %v1047 = vmul.f32 %v1045, %v1045
    %v1048 = vsub.f32 %v1046, %v1044
    %v1049 = vsub.f32 %v1047, %v1045
    %v1050 = vmul.f32 %v895, %v1048
    %v1051 = vmul.f32 %v896, %v1049
    %v1052 = vsub.f32 %v1044, %v1050
    %v1053 = vsub.f32 %v1045, %v1051
    %v1054 = vmul.f32 %v1052, %v1052
    %v1055 = vmul.f32 %v1053, %v1053
    %v1056 = vsub.f32 %v1054, %v1052
    %v1057 = vsub.f32 %v1055, %v1053
    %v1058 = vmul.f32 %v933, %v1056
    %v1059 = vmul.f32 %v934, %v1057
    %v1060 = vsub.f32 %v1052, %v1058
    %v1061 = vsub.f32 %v1053, %v1059
    %v1062 = vmul.f32 %v1060, %v1060
    %v1063 = vmul.f32 %v1061, %v1061
    %v1064 = vsub.f32 %v1062, %v1060
    %v1065 = vsub.f32 %v1063, %v1061
    %v1066 = vmul.f32 %v971, %v1064
    %v1067 = vmul.f32 %v972, %v1065
    %v1068 = vsub.f32 %v1060, %v1066
    %v1069 = vsub.f32 %v1061, %v1067
    %v1070 = vmul.f32 %v1068, %v1068
    %v1071 = vmul.f32 %v1069, %v1069
    %v1072 = vsub.f32 %v1070, %v1068
    %v1073 = vsub.f32 %v1071, %v1069
    %v1074 = vmul.f32 %v1009, %v1072
    %v1075 = vmul.f32 %v1010, %v1073
    %v1076 = vsub.f32 %v1068, %v1074
    %v1077 = vsub.f32 %v1069, %v1075
    %v1078 = vmax.f32 %v1076, 0.0
    %v1079 = vmax.f32 %v1077, 0.0
    %v1080 = vmin.f32 %v1078, 1.0
    %v1081 = vmin.f32 %v1079, 1.0
    %s1082 = scalar_lea.vmem [#allocation9], 16
    %1083 = vst [vmem:[%s1082] sm:$0xff] %v1080
    %1084 = vst [vmem:[%s1082 + $0x8] sm:$0xff] %v1081
    // Predicated region
    $region30: #{iterable_refine.1} parent=1 // pred_check
      _
    $region31: #{iterable_refine.1} parent=1 // pred_check_branch
      %1086 = sbr.rel (0) target = $region33
    $region32: #{iterable_refine.1} parent=1 // pred_region
      %s1088 = ssub.s32 512, 512
      %1089 = vsyncadd [#allocation4], %s1088
      %s1090 = sshll.u32 [#allocation9], 4
      %s1091 = int_to_ptr.vmem [resolvable:$true] %s1090
      %1096 = dma.vmem_to_hbm [thread:$0]  %s1091, 512, %s4, [#allocation4], 128, 128, 8
    $region33: #{iterable_refine.1} parent=1 // pred_fallthru
      _
    // Predicated region
    $region34: #{iterable_refine.1} parent=1 // pred_check
      _
    $region35: #{iterable_refine.1} parent=1 // pred_check_branch
      %1098 = sbr.rel (0) target = $region37
    $region36: #{iterable_refine.1} parent=1 // pred_region
      %1099 = dma.done [#allocation4], 512
    $region37: #{iterable_refine.1} parent=1 // pred_fallthru
      _
    %1100 = vsyncpa [#allocation3], 1
    %1101 = vsyncpa [#allocation4], 1
    %1102 = vsyncpa [#allocation5], 1
    %1103 = vsyncpa [#allocation7], 1

</llo_original>
